<compile_context>
chip_gen: v7x
topology: tpu7x:2x2x1
jax: 0.10.0
libtpu: 0.0.40
codegen_flags: <defaults>
</compile_context>

<pallas_src>
import functools

import jax
import jax.numpy as jnp
from jax import lax
from jax.experimental import pallas as pl
from jax.experimental.pallas import tpu as pltpu


def _fusion_kernel(nhead, head_dim, compute_dtype,
                   tgt_ref, qpos_ref, mem_ref, pos_ref, mask_ref,
                   wq_ref, wk_ref, wv_ref, wo_ref,
                   bq_ref, bk_ref, bv_ref, bo_ref,
                   out_ref):
    f32 = jnp.float32
    # Exact reciprocal in f32 mode keeps the tight reference check; approx (EUP)
    # in bf16 mode.  Either way it acts on a tiny (rows, 1) vector because the
    # softmax normalization is deferred to the context (see below).
    approx = jnp.dtype(compute_dtype) != jnp.dtype(jnp.float32)

    # ---- Projections: lane-dense 2-D slabs on the MXU, f32 accumulation.
    # (Fused QKV does not apply: Q / K / V have three different inputs.)
    q_in = (tgt_ref[...] + qpos_ref[...]).astype(compute_dtype)
    k_in = (mem_ref[...] + pos_ref[...]).astype(compute_dtype)
    v_in = mem_ref[...].astype(compute_dtype)

    q = (jnp.dot(q_in, wq_ref[...], preferred_element_type=f32) + bq_ref[...]).astype(compute_dtype)
    k = (jnp.dot(k_in, wk_ref[...], preferred_element_type=f32) + bk_ref[...]).astype(compute_dtype)
    v = (jnp.dot(v_in, wv_ref[...], preferred_element_type=f32) + bv_ref[...]).astype(compute_dtype)

    # ---- Attention over ALL flattened key rows, restricted to the correct batch
    # (and non-padded keys) by the precomputed additive mask.  Everything stays
    # rank-2 and lane-dense; no transposes or batch-dim reshapes in the kernel.
    ctxs = []
    for h in range(nhead):
        lo = h * head_dim
        qh = q[:, lo:lo + head_dim]                              # (R, hd) lane slice
        kh = k[:, lo:lo + head_dim]                              # (SN, hd)
        vh = v[:, lo:lo + head_dim]                              # (SN, hd)

        s = lax.dot_general(qh, kh, (((1,), (1,)), ((), ())),
                            preferred_element_type=f32)          # (R, SN), rhs-transposed MXU
        s = s + mask_ref[...]                                    # additive mask, no broadcast temp
        m = jnp.max(s, axis=-1, keepdims=True)
        e = jnp.exp(s - m)                                       # unnormalized, in [0, 1]
        denom = jnp.sum(e, axis=-1, keepdims=True)
        ctx = jnp.dot(e.astype(compute_dtype), vh,
                      preferred_element_type=f32)                # (R, hd)
        ctx = ctx * pl.reciprocal(denom, approx=approx)          # deferred softmax normalization
        ctxs.append(ctx.astype(compute_dtype))

    # Lane-concatenate per-head contexts -> single (R, E) @ (E, E) output projection.
    ctx_all = jnp.concatenate(ctxs, axis=-1)
    o = jnp.dot(ctx_all, wo_ref[...], preferred_element_type=f32) + bo_ref[...]

    # Elementwise gating; written back in the original (seq, batch) row order.
    out_ref[...] = (tgt_ref[...] * o).astype(out_ref.dtype)


def _pick_query_block(L, N, E, SN, cdt_bytes, max_rows=1024, vmem_budget=10 * 2**20):
    """Largest query block tq (divisor of L) whose per-step working set fits the
    VMEM budget and whose row count R = tq*N satisfies the (8,128) sublane rule.
    Fewest/biggest steps is best on single-TC v5e/v6e.
    TODO(synk): on v7x prefer an even >=2 step count so both TensorCores get work."""
    def est_bytes(tq):
        R = tq * N
        stream = 2 * 3 * R * E * 4                                   # tgt/qpos/out, double-buffered
        resident = 2 * (2 * SN * E * 4 + R * SN * 4 + 4 * (E * E + E) * cdt_bytes)
        temps = 3 * R * E * 4 + 2 * SN * E * cdt_bytes + 2 * R * SN * 4 + R * E * cdt_bytes
        return stream + resident + temps

    divisors = [d for d in range(1, L + 1) if L % d == 0]
    aligned = [d for d in divisors if d == L or (d * N) % 8 == 0]
    good = [d for d in aligned if d * N <= max_rows and est_bytes(d) <= vmem_budget]
    if good:
        return max(good)
    ok = [d for d in aligned if est_bytes(d) <= vmem_budget]
    return min(ok) if ok else min(aligned)


def vision_language_fusion(tgt, memory, key_padding_mask, pos, query_pos,
                           params, nhead, compute_dtype=jnp.bfloat16,
                           single_buffer_weights=False):
    """tgt: (L, N, E); memory/pos: (S, N, E); query_pos: (L, N, E);
    key_padding_mask: (N, S) bool or None.  Returns (L, N, E) float32.

    compute_dtype sets the MXU operand dtype (bf16 default: higher MXU rate and
    half the operand traffic on all generations); accumulation and all
    elementwise math stay float32."""
    L, N, E = tgt.shape
    S = memory.shape[0]
    SN = S * N
    head_dim = E // nhead
    scale = 1.0 / float(head_dim) ** 0.5
    cdt_bytes = jnp.dtype(compute_dtype).itemsize

    if query_pos is None:
        query_pos = jnp.zeros_like(tgt)   # TODO(synk): plumb static "no pos" flags to skip the adds
    if pos is None:
        pos = jnp.zeros_like(memory)

    # Native (seq, batch, E) order kept end-to-end; only free 2-D flattening here
    # (row order (l, n) / (s, m)), so there is NO wrapper HBM transpose round trip.
    tgt2 = tgt.reshape(L * N, E).astype(jnp.float32)
    qpos2 = query_pos.reshape(L * N, E).astype(jnp.float32)
    mem2 = memory.reshape(SN, E).astype(jnp.float32)
    pos2 = pos.reshape(SN, E).astype(jnp.float32)

    tq = _pick_query_block(L, N, E, SN, cdt_bytes)
    R = tq * N
    steps = L // tq

    # Additive mask over the flattened score matrix: allow only same-batch,
    # non-padded keys; everything else gets -1e9 (exp underflows to exactly 0).
    # The mask has a constant index_map -> DMA'd once, resident across all steps.
    row_b = jnp.arange(R, dtype=jnp.int32) % N
    col_b = jnp.arange(SN, dtype=jnp.int32) % N
    allow = row_b[:, None] == col_b[None, :]
    if key_padding_mask is not None:
        padded_col = key_padding_mask.T.reshape(SN)        # col c -> kpm[c % N, c // N]
        allow = allow & (~padded_col)[None, :]
    add_mask = jnp.where(allow, 0.0, -1e9).astype(jnp.float32)

    # Pre-transposed weights (kernel computes x @ W.T directly); 1/sqrt(head_dim)
    # folded into the Q projection -> zero in-kernel transposes / score scaling.
    wq_t = (params["wq"].T * scale).astype(compute_dtype)
    wk_t = params["wk"].T.astype(compute_dtype)
    wv_t = params["wv"].T.astype(compute_dtype)
    wo_t = params["wo"].T.astype(compute_dtype)
    bq2 = (params["bq"] * scale).reshape(1, E).astype(jnp.float32)
    bk2 = params["bk"].reshape(1, E).astype(jnp.float32)
    bv2 = params["bv"].reshape(1, E).astype(jnp.float32)
    bo2 = params["bo"].reshape(1, E).astype(jnp.float32)

    stream = lambda i: (i, 0)     # query-row blocks
    const2 = lambda i: (0, 0)     # resident operands (block index never changes)

    # Optional single-buffering of the never-changing weight operands (saves 1x
    # their VMEM; useful for large E on v7x's 64 MiB).  Off by default.
    wmode = {"pipeline_mode": pl.Buffered(1)} if single_buffer_weights else {}

    flops = (4 * L * N * E * E                      # Q + output projections
             + steps * 4 * SN * E * E               # K/V projections (recomputed per step)
             + 4 * (L * N) * SN * E)                # QK^T + PV (block-diag dense)
    transcendentals = nhead * (L * N) * SN
    bytes_accessed = 4 * (3 * L * N * E + 2 * SN * E + R * SN + 4 * E) + cdt_bytes * 4 * E * E

    out2 = pl.pallas_call(
        functools.partial(_fusion_kernel, nhead, head_dim, compute_dtype),
        out_shape=jax.ShapeDtypeStruct((L * N, E), jnp.float32),
        grid_spec=pltpu.PrefetchScalarGridSpec(
            num_scalar_prefetch=0,
            grid=(steps,),
            in_specs=[
                pl.BlockSpec((R, E), stream),               # tgt rows
                pl.BlockSpec((R, E), stream),               # query_pos rows
                pl.BlockSpec((SN, E), const2),              # memory rows (resident)
                pl.BlockSpec((SN, E), const2),              # pos rows (resident)
                pl.BlockSpec((R, SN), const2),              # additive mask (resident)
                pl.BlockSpec((E, E), const2, **wmode),      # Wq.T * scale
                pl.BlockSpec((E, E), const2, **wmode),      # Wk.T
                pl.BlockSpec((E, E), const2, **wmode),      # Wv.T
                pl.BlockSpec((E, E), const2, **wmode),      # Wo.T
                pl.BlockSpec((1, E), const2, **wmode),      # bq * scale
                pl.BlockSpec((1, E), const2, **wmode),      # bk
                pl.BlockSpec((1, E), const2, **wmode),      # bv
                pl.BlockSpec((1, E), const2, **wmode),      # bo
            ],
            out_specs=pl.BlockSpec((R, E), stream),
        ),
        compiler_params=pltpu.CompilerParams(
            dimension_semantics=("parallel",),
            vmem_limit_bytes=32 * 1024 * 1024),
        cost_estimate=pl.CostEstimate(
            flops=int(flops),
            transcendentals=int(transcendentals),
            bytes_accessed=int(bytes_accessed)),
    )(tgt2, qpos2, mem2, pos2, add_mask,
      wq_t, wk_t, wv_t, wo_t, bq2, bk2, bv2, bo2)

    return out2.reshape(L, N, E)                    # free reshape back to (L, N, E)


def reference_fusion(tgt, memory, key_padding_mask, pos, query_pos, params, nhead):
    """Pure-JAX reference mirroring nn.MultiheadAttention followed by tgt * out."""
    L, N, E = tgt.shape
    S = memory.shape[0]
    hd = E // nhead
    wq, wk, wv, wo = params["wq"], params["wk"], params["wv"], params["wo"]
    bq, bk, bv, bo = params["bq"], params["bk"], params["bv"], params["bo"]

    q = (tgt + query_pos) @ wq.T + bq
    k = (memory + pos) @ wk.T + bk
    v = memory @ wv.T + bv

    def split_heads(x, seq):
        return x.transpose(1, 0, 2).reshape(N, seq, nhead, hd).transpose(0, 2, 1, 3)

    qh, kh, vh = split_heads(q, L), split_heads(k, S), split_heads(v, S)
    s = jnp.einsum("nhld,nhsd->nhls", qh, kh) / jnp.sqrt(hd).astype(jnp.float32)
    if key_padding_mask is not None:
        s = jnp.where(key_padding_mask[:, None, None, :], -jnp.inf, s)
    p = jax.nn.softmax(s, axis=-1)
    o = jnp.einsum("nhls,nhsd->nhld", p, vh)
    o = o.transpose(0, 2, 1, 3).reshape(N, L, E) @ wo.T + bo
    o = o.transpose(1, 0, 2)
    return tgt * o


if __name__ == "__main__":
    d_model, nhead = 32, 4
    L, S, N = 16, 8, 2

    key = jax.random.PRNGKey(0)
    ks = jax.random.split(key, 12)

    # Deterministic synthetic parameters (shapes follow nn.MultiheadAttention).
    params = {
        "wq": jax.random.normal(ks[0], (d_model, d_model), jnp.float32) * 0.1,
        "wk": jax.random.normal(ks[1], (d_model, d_model), jnp.float32) * 0.1,
        "wv": jax.random.normal(ks[2], (d_model, d_model), jnp.float32) * 0.1,
        "wo": jax.random.normal(ks[3], (d_model, d_model), jnp.float32) * 0.1,
        "bq": jax.random.normal(ks[4], (d_model,), jnp.float32) * 0.05,
        "bk": jax.random.normal(ks[5], (d_model,), jnp.float32) * 0.05,
        "bv": jax.random.normal(ks[6], (d_model,), jnp.float32) * 0.05,
        "bo": jax.random.normal(ks[7], (d_model,), jnp.float32) * 0.05,
    }

    tgt = jax.random.normal(ks[8], (L, N, d_model), jnp.float32)
    memory = jax.random.normal(ks[9], (S, N, d_model), jnp.float32)
    query_pos = jax.random.normal(ks[10], (L, N, d_model), jnp.float32) * 0.1
    pos = jax.random.normal(ks[11], (S, N, d_model), jnp.float32) * 0.1
    # Pad out the last two keys of batch element 1.
    key_padding_mask = jnp.zeros((N, S), jnp.bool_).at[1, -2:].set(True)

    ref = reference_fusion(tgt, memory, key_padding_mask, pos, query_pos,
                           params, nhead)

    # f32 MXU operands: tight correctness check.
    out_f32 = jax.block_until_ready(
        vision_language_fusion(tgt, memory, key_padding_mask, pos, query_pos,
                               params, nhead, compute_dtype=jnp.float32))
    assert out_f32.shape == (L, N, d_model)
    assert jnp.allclose(out_f32, ref, atol=1e-5, rtol=1e-5), "f32 kernel mismatch vs reference"

    # bf16 MXU operands (default fast path): f32 accumulation, looser tolerance.
    out_bf16 = jax.block_until_ready(
        vision_language_fusion(tgt, memory, key_padding_mask, pos, query_pos,
                               params, nhead))
    assert out_bf16.shape == (L, N, d_model)
    assert jnp.allclose(out_bf16, ref, atol=1e-1, rtol=1e-1), "bf16 kernel mismatch vs reference"

    print("KERNEL_OK")
</pallas_src>

<mosaic_0001>
module attributes {stable_mosaic.version = 11 : i64} {
  func.func @_fusion_kernel(%arg0: i32, %arg1: memref<32x32xf32, #tpu.memory_space<vmem>>, %arg2: memref<32x32xf32, #tpu.memory_space<vmem>>, %arg3: memref<16x32xf32, #tpu.memory_space<vmem>>, %arg4: memref<16x32xf32, #tpu.memory_space<vmem>>, %arg5: memref<32x16xf32, #tpu.memory_space<vmem>>, %arg6: memref<32x32xf32, #tpu.memory_space<vmem>>, %arg7: memref<32x32xf32, #tpu.memory_space<vmem>>, %arg8: memref<32x32xf32, #tpu.memory_space<vmem>>, %arg9: memref<32x32xf32, #tpu.memory_space<vmem>>, %arg10: memref<1x32xf32, #tpu.memory_space<vmem>>, %arg11: memref<1x32xf32, #tpu.memory_space<vmem>>, %arg12: memref<1x32xf32, #tpu.memory_space<vmem>>, %arg13: memref<1x32xf32, #tpu.memory_space<vmem>>, %arg14: memref<32x32xf32, #tpu.memory_space<vmem>>) attributes {dimension_semantics = [#tpu.dimension_semantics<parallel>], iteration_bounds = array<i64: 1>, scalar_prefetch = 0 : i64, scratch_operands = 0 : i64, tpu.core_type = #tpu.core_type<tc>, window_params = [{transform_indices = @transform_0, window_bounds = array<i64: 32, 32>}, {transform_indices = @transform_1, window_bounds = array<i64: 32, 32>}, {pipeline_mode = #tpu.pipeline_mode<synchronous>, transform_indices = @transform_2, window_bounds = array<i64: 16, 32>}, {pipeline_mode = #tpu.pipeline_mode<synchronous>, transform_indices = @transform_3, window_bounds = array<i64: 16, 32>}, {pipeline_mode = #tpu.pipeline_mode<synchronous>, transform_indices = @transform_4, window_bounds = array<i64: 32, 16>}, {pipeline_mode = #tpu.pipeline_mode<synchronous>, transform_indices = @transform_5, window_bounds = array<i64: 32, 32>}, {pipeline_mode = #tpu.pipeline_mode<synchronous>, transform_indices = @transform_6, window_bounds = array<i64: 32, 32>}, {pipeline_mode = #tpu.pipeline_mode<synchronous>, transform_indices = @transform_7, window_bounds = array<i64: 32, 32>}, {pipeline_mode = #tpu.pipeline_mode<synchronous>, transform_indices = @transform_8, window_bounds = array<i64: 32, 32>}, {pipeline_mode = #tpu.pipeline_mode<synchronous>, transform_indices = @transform_9, window_bounds = array<i64: 1, 32>}, {pipeline_mode = #tpu.pipeline_mode<synchronous>, transform_indices = @transform_10, window_bounds = array<i64: 1, 32>}, {pipeline_mode = #tpu.pipeline_mode<synchronous>, transform_indices = @transform_11, window_bounds = array<i64: 1, 32>}, {pipeline_mode = #tpu.pipeline_mode<synchronous>, transform_indices = @transform_12, window_bounds = array<i64: 1, 32>}, {transform_indices = @transform_13, window_bounds = array<i64: 32, 32>}]} {
    %c0 = arith.constant 0 : index
    %c0_0 = arith.constant 0 : index
    %0 = vector.load %arg1[%c0, %c0_0] : memref<32x32xf32, #tpu.memory_space<vmem>>, vector<32x32xf32>
    %c0_1 = arith.constant 0 : index
    %c0_2 = arith.constant 0 : index
    %1 = vector.load %arg2[%c0_1, %c0_2] : memref<32x32xf32, #tpu.memory_space<vmem>>, vector<32x32xf32>
    %2 = arith.addf %0, %1 : vector<32x32xf32>
    %c0_3 = arith.constant 0 : index
    %c0_4 = arith.constant 0 : index
    %3 = vector.load %arg3[%c0_3, %c0_4] : memref<16x32xf32, #tpu.memory_space<vmem>>, vector<16x32xf32>
    %c0_5 = arith.constant 0 : index
    %c0_6 = arith.constant 0 : index
    %4 = vector.load %arg4[%c0_5, %c0_6] : memref<16x32xf32, #tpu.memory_space<vmem>>, vector<16x32xf32>
    %5 = arith.addf %3, %4 : vector<16x32xf32>
    %c0_7 = arith.constant 0 : index
    %c0_8 = arith.constant 0 : index
    %6 = vector.load %arg3[%c0_7, %c0_8] : memref<16x32xf32, #tpu.memory_space<vmem>>, vector<16x32xf32>
    %c0_9 = arith.constant 0 : index
    %c0_10 = arith.constant 0 : index
    %7 = vector.load %arg6[%c0_9, %c0_10] : memref<32x32xf32, #tpu.memory_space<vmem>>, vector<32x32xf32>
    %cst = arith.constant dense<0.000000e+00> : vector<32x32xf32>
    %8 = tpu.matmul %2, %7, %cst {dimension_numbers = #tpu.dot_dimension_numbers<[1], [0], [0], [1], [0, 0, 1, 1], [], []>} : vector<32x32xf32>, vector<32x32xf32>, vector<32x32xf32> -> vector<32x32xf32>
    %c0_11 = arith.constant 0 : index
    %c0_12 = arith.constant 0 : index
    %9 = vector.load %arg10[%c0_11, %c0_12] : memref<1x32xf32, #tpu.memory_space<vmem>>, vector<1x32xf32>
    %10 = vector.broadcast %9 : vector<1x32xf32> to vector<32x32xf32>
    %11 = arith.addf %8, %10 : vector<32x32xf32>
    %c0_13 = arith.constant 0 : index
    %c0_14 = arith.constant 0 : index
    %12 = vector.load %arg7[%c0_13, %c0_14] : memref<32x32xf32, #tpu.memory_space<vmem>>, vector<32x32xf32>
    %cst_15 = arith.constant dense<0.000000e+00> : vector<16x32xf32>
    %13 = tpu.matmul %5, %12, %cst_15 {dimension_numbers = #tpu.dot_dimension_numbers<[1], [0], [0], [1], [0, 0, 1, 1], [], []>} : vector<16x32xf32>, vector<32x32xf32>, vector<16x32xf32> -> vector<16x32xf32>
    %c0_16 = arith.constant 0 : index
    %c0_17 = arith.constant 0 : index
    %14 = vector.load %arg11[%c0_16, %c0_17] : memref<1x32xf32, #tpu.memory_space<vmem>>, vector<1x32xf32>
    %15 = vector.broadcast %14 : vector<1x32xf32> to vector<16x32xf32>
    %16 = arith.addf %13, %15 : vector<16x32xf32>
    %c0_18 = arith.constant 0 : index
    %c0_19 = arith.constant 0 : index
    %17 = vector.load %arg8[%c0_18, %c0_19] : memref<32x32xf32, #tpu.memory_space<vmem>>, vector<32x32xf32>
    %cst_20 = arith.constant dense<0.000000e+00> : vector<16x32xf32>
    %18 = tpu.matmul %6, %17, %cst_20 {dimension_numbers = #tpu.dot_dimension_numbers<[1], [0], [0], [1], [0, 0, 1, 1], [], []>} : vector<16x32xf32>, vector<32x32xf32>, vector<16x32xf32> -> vector<16x32xf32>
    %c0_21 = arith.constant 0 : index
    %c0_22 = arith.constant 0 : index
    %19 = vector.load %arg12[%c0_21, %c0_22] : memref<1x32xf32, #tpu.memory_space<vmem>>, vector<1x32xf32>
    %20 = vector.broadcast %19 : vector<1x32xf32> to vector<16x32xf32>
    %21 = arith.addf %18, %20 : vector<16x32xf32>
    %22 = vector.extract_strided_slice %11 {offsets = [0, 0], sizes = [32, 8], strides = [1, 1]} : vector<32x32xf32> to vector<32x8xf32>
    %23 = vector.extract_strided_slice %16 {offsets = [0, 0], sizes = [16, 8], strides = [1, 1]} : vector<16x32xf32> to vector<16x8xf32>
    %24 = vector.extract_strided_slice %21 {offsets = [0, 0], sizes = [16, 8], strides = [1, 1]} : vector<16x32xf32> to vector<16x8xf32>
    %cst_23 = arith.constant dense<0.000000e+00> : vector<32x16xf32>
    %25 = tpu.matmul %22, %23, %cst_23 {dimension_numbers = #tpu.dot_dimension_numbers<[1], [1], [0], [0], [0, 0, 1, 0], [], []>} : vector<32x8xf32>, vector<16x8xf32>, vector<32x16xf32> -> vector<32x16xf32>
    %c0_24 = arith.constant 0 : index
    %c0_25 = arith.constant 0 : index
    %26 = vector.load %arg5[%c0_24, %c0_25] : memref<32x16xf32, #tpu.memory_space<vmem>>, vector<32x16xf32>
    %27 = arith.addf %25, %26 : vector<32x16xf32>
    %cst_26 = arith.constant dense<0xFF800000> : vector<32xf32>
    %28 = vector.multi_reduction <maximumf>, %27, %cst_26 [1] : vector<32x16xf32> to vector<32xf32>
    %29 = vector.shape_cast %28 : vector<32xf32> to vector<32x1xf32>
    %30 = vector.broadcast %29 : vector<32x1xf32> to vector<32x16xf32>
    %31 = arith.subf %27, %30 : vector<32x16xf32>
    %32 = math.exp %31 : vector<32x16xf32>
    %cst_27 = arith.constant dense<0.000000e+00> : vector<32xf32>
    %33 = vector.multi_reduction <add>, %32, %cst_27 [1] : vector<32x16xf32> to vector<32xf32>
    %34 = vector.shape_cast %33 : vector<32xf32> to vector<32x1xf32>
    %cst_28 = arith.constant dense<0.000000e+00> : vector<32x8xf32>
    %35 = tpu.matmul %32, %24, %cst_28 {dimension_numbers = #tpu.dot_dimension_numbers<[1], [0], [0], [1], [0, 0, 1, 1], [], []>} : vector<32x16xf32>, vector<16x8xf32>, vector<32x8xf32> -> vector<32x8xf32>
    %36 = tpu.reciprocal %34 : vector<32x1xf32> -> vector<32x1xf32>
    %37 = vector.broadcast %36 : vector<32x1xf32> to vector<32x8xf32>
    %38 = arith.mulf %35, %37 : vector<32x8xf32>
    %39 = vector.extract_strided_slice %11 {offsets = [0, 8], sizes = [32, 8], strides = [1, 1]} : vector<32x32xf32> to vector<32x8xf32>
    %40 = vector.extract_strided_slice %16 {offsets = [0, 8], sizes = [16, 8], strides = [1, 1]} : vector<16x32xf32> to vector<16x8xf32>
    %41 = vector.extract_strided_slice %21 {offsets = [0, 8], sizes = [16, 8], strides = [1, 1]} : vector<16x32xf32> to vector<16x8xf32>
    %cst_29 = arith.constant dense<0.000000e+00> : vector<32x16xf32>
    %42 = tpu.matmul %39, %40, %cst_29 {dimension_numbers = #tpu.dot_dimension_numbers<[1], [1], [0], [0], [0, 0, 1, 0], [], []>} : vector<32x8xf32>, vector<16x8xf32>, vector<32x16xf32> -> vector<32x16xf32>
    %c0_30 = arith.constant 0 : index
    %c0_31 = arith.constant 0 : index
    %43 = vector.load %arg5[%c0_30, %c0_31] : memref<32x16xf32, #tpu.memory_space<vmem>>, vector<32x16xf32>
    %44 = arith.addf %42, %43 : vector<32x16xf32>
    %cst_32 = arith.constant dense<0xFF800000> : vector<32xf32>
    %45 = vector.multi_reduction <maximumf>, %44, %cst_32 [1] : vector<32x16xf32> to vector<32xf32>
    %46 = vector.shape_cast %45 : vector<32xf32> to vector<32x1xf32>
    %47 = vector.broadcast %46 : vector<32x1xf32> to vector<32x16xf32>
    %48 = arith.subf %44, %47 : vector<32x16xf32>
    %49 = math.exp %48 : vector<32x16xf32>
    %cst_33 = arith.constant dense<0.000000e+00> : vector<32xf32>
    %50 = vector.multi_reduction <add>, %49, %cst_33 [1] : vector<32x16xf32> to vector<32xf32>
    %51 = vector.shape_cast %50 : vector<32xf32> to vector<32x1xf32>
    %cst_34 = arith.constant dense<0.000000e+00> : vector<32x8xf32>
    %52 = tpu.matmul %49, %41, %cst_34 {dimension_numbers = #tpu.dot_dimension_numbers<[1], [0], [0], [1], [0, 0, 1, 1], [], []>} : vector<32x16xf32>, vector<16x8xf32>, vector<32x8xf32> -> vector<32x8xf32>
    %53 = tpu.reciprocal %51 : vector<32x1xf32> -> vector<32x1xf32>
    %54 = vector.broadcast %53 : vector<32x1xf32> to vector<32x8xf32>
    %55 = arith.mulf %52, %54 : vector<32x8xf32>
    %56 = vector.extract_strided_slice %11 {offsets = [0, 16], sizes = [32, 8], strides = [1, 1]} : vector<32x32xf32> to vector<32x8xf32>
    %57 = vector.extract_strided_slice %16 {offsets = [0, 16], sizes = [16, 8], strides = [1, 1]} : vector<16x32xf32> to vector<16x8xf32>
    %58 = vector.extract_strided_slice %21 {offsets = [0, 16], sizes = [16, 8], strides = [1, 1]} : vector<16x32xf32> to vector<16x8xf32>
    %cst_35 = arith.constant dense<0.000000e+00> : vector<32x16xf32>
    %59 = tpu.matmul %56, %57, %cst_35 {dimension_numbers = #tpu.dot_dimension_numbers<[1], [1], [0], [0], [0, 0, 1, 0], [], []>} : vector<32x8xf32>, vector<16x8xf32>, vector<32x16xf32> -> vector<32x16xf32>
    %c0_36 = arith.constant 0 : index
    %c0_37 = arith.constant 0 : index
    %60 = vector.load %arg5[%c0_36, %c0_37] : memref<32x16xf32, #tpu.memory_space<vmem>>, vector<32x16xf32>
    %61 = arith.addf %59, %60 : vector<32x16xf32>
    %cst_38 = arith.constant dense<0xFF800000> : vector<32xf32>
    %62 = vector.multi_reduction <maximumf>, %61, %cst_38 [1] : vector<32x16xf32> to vector<32xf32>
    %63 = vector.shape_cast %62 : vector<32xf32> to vector<32x1xf32>
    %64 = vector.broadcast %63 : vector<32x1xf32> to vector<32x16xf32>
    %65 = arith.subf %61, %64 : vector<32x16xf32>
    %66 = math.exp %65 : vector<32x16xf32>
    %cst_39 = arith.constant dense<0.000000e+00> : vector<32xf32>
    %67 = vector.multi_reduction <add>, %66, %cst_39 [1] : vector<32x16xf32> to vector<32xf32>
    %68 = vector.shape_cast %67 : vector<32xf32> to vector<32x1xf32>
    %cst_40 = arith.constant dense<0.000000e+00> : vector<32x8xf32>
    %69 = tpu.matmul %66, %58, %cst_40 {dimension_numbers = #tpu.dot_dimension_numbers<[1], [0], [0], [1], [0, 0, 1, 1], [], []>} : vector<32x16xf32>, vector<16x8xf32>, vector<32x8xf32> -> vector<32x8xf32>
    %70 = tpu.reciprocal %68 : vector<32x1xf32> -> vector<32x1xf32>
    %71 = vector.broadcast %70 : vector<32x1xf32> to vector<32x8xf32>
    %72 = arith.mulf %69, %71 : vector<32x8xf32>
    %73 = vector.extract_strided_slice %11 {offsets = [0, 24], sizes = [32, 8], strides = [1, 1]} : vector<32x32xf32> to vector<32x8xf32>
    %74 = vector.extract_strided_slice %16 {offsets = [0, 24], sizes = [16, 8], strides = [1, 1]} : vector<16x32xf32> to vector<16x8xf32>
    %75 = vector.extract_strided_slice %21 {offsets = [0, 24], sizes = [16, 8], strides = [1, 1]} : vector<16x32xf32> to vector<16x8xf32>
    %cst_41 = arith.constant dense<0.000000e+00> : vector<32x16xf32>
    %76 = tpu.matmul %73, %74, %cst_41 {dimension_numbers = #tpu.dot_dimension_numbers<[1], [1], [0], [0], [0, 0, 1, 0], [], []>} : vector<32x8xf32>, vector<16x8xf32>, vector<32x16xf32> -> vector<32x16xf32>
    %c0_42 = arith.constant 0 : index
    %c0_43 = arith.constant 0 : index
    %77 = vector.load %arg5[%c0_42, %c0_43] : memref<32x16xf32, #tpu.memory_space<vmem>>, vector<32x16xf32>
    %78 = arith.addf %76, %77 : vector<32x16xf32>
    %cst_44 = arith.constant dense<0xFF800000> : vector<32xf32>
    %79 = vector.multi_reduction <maximumf>, %78, %cst_44 [1] : vector<32x16xf32> to vector<32xf32>
    %80 = vector.shape_cast %79 : vector<32xf32> to vector<32x1xf32>
    %81 = vector.broadcast %80 : vector<32x1xf32> to vector<32x16xf32>
    %82 = arith.subf %78, %81 : vector<32x16xf32>
    %83 = math.exp %82 : vector<32x16xf32>
    %cst_45 = arith.constant dense<0.000000e+00> : vector<32xf32>
    %84 = vector.multi_reduction <add>, %83, %cst_45 [1] : vector<32x16xf32> to vector<32xf32>
    %85 = vector.shape_cast %84 : vector<32xf32> to vector<32x1xf32>
    %cst_46 = arith.constant dense<0.000000e+00> : vector<32x8xf32>
    %86 = tpu.matmul %83, %75, %cst_46 {dimension_numbers = #tpu.dot_dimension_numbers<[1], [0], [0], [1], [0, 0, 1, 1], [], []>} : vector<32x16xf32>, vector<16x8xf32>, vector<32x8xf32> -> vector<32x8xf32>
    %87 = tpu.reciprocal %85 : vector<32x1xf32> -> vector<32x1xf32>
    %88 = vector.broadcast %87 : vector<32x1xf32> to vector<32x8xf32>
    %89 = arith.mulf %86, %88 : vector<32x8xf32>
    %90 = tpu.concatenate %38, %55, %72, %89 in 1 : vector<32x8xf32>, vector<32x8xf32>, vector<32x8xf32>, vector<32x8xf32> -> vector<32x32xf32>
    %c0_47 = arith.constant 0 : index
    %c0_48 = arith.constant 0 : index
    %91 = vector.load %arg9[%c0_47, %c0_48] : memref<32x32xf32, #tpu.memory_space<vmem>>, vector<32x32xf32>
    %cst_49 = arith.constant dense<0.000000e+00> : vector<32x32xf32>
    %92 = tpu.matmul %90, %91, %cst_49 {dimension_numbers = #tpu.dot_dimension_numbers<[1], [0], [0], [1], [0, 0, 1, 1], [], []>} : vector<32x32xf32>, vector<32x32xf32>, vector<32x32xf32> -> vector<32x32xf32>
    %c0_50 = arith.constant 0 : index
    %c0_51 = arith.constant 0 : index
    %93 = vector.load %arg13[%c0_50, %c0_51] : memref<1x32xf32, #tpu.memory_space<vmem>>, vector<1x32xf32>
    %94 = vector.broadcast %93 : vector<1x32xf32> to vector<32x32xf32>
    %95 = arith.addf %92, %94 : vector<32x32xf32>
    %c0_52 = arith.constant 0 : index
    %c0_53 = arith.constant 0 : index
    %96 = vector.load %arg1[%c0_52, %c0_53] : memref<32x32xf32, #tpu.memory_space<vmem>>, vector<32x32xf32>
    %97 = arith.mulf %96, %95 : vector<32x32xf32>
    %c0_54 = arith.constant 0 : index
    %c0_55 = arith.constant 0 : index
    %98 = vector.load %arg14[%c0_54, %c0_55] : memref<32x32xf32, #tpu.memory_space<vmem>>, vector<32x32xf32>
    tpu.vector_store %arg14[%c0_54, %c0_55], %97 {strides = array<i32>} : memref<32x32xf32, #tpu.memory_space<vmem>>, vector<32x32xf32>,
    return
  }
  func.func @transform_0(%arg0: i32) -> (i32, i32) {
    %c0_i32 = arith.constant 0 : i32
    %c0_i32_0 = arith.constant 0 : i32
    return %arg0, %c0_i32 : i32, i32
  }
  func.func @transform_1(%arg0: i32) -> (i32, i32) {
    %c0_i32 = arith.constant 0 : i32
    %c0_i32_0 = arith.constant 0 : i32
    return %arg0, %c0_i32 : i32, i32
  }
  func.func @transform_2(%arg0: i32) -> (i32, i32) {
    %c0_i32 = arith.constant 0 : i32
    %c0_i32_0 = arith.constant 0 : i32
    %c0_i32_1 = arith.constant 0 : i32
    return %c0_i32, %c0_i32_0 : i32, i32
  }
  func.func @transform_3(%arg0: i32) -> (i32, i32) {
    %c0_i32 = arith.constant 0 : i32
    %c0_i32_0 = arith.constant 0 : i32
    %c0_i32_1 = arith.constant 0 : i32
    return %c0_i32, %c0_i32_0 : i32, i32
  }
  func.func @transform_4(%arg0: i32) -> (i32, i32) {
    %c0_i32 = arith.constant 0 : i32
    %c0_i32_0 = arith.constant 0 : i32
    %c0_i32_1 = arith.constant 0 : i32
    return %c0_i32, %c0_i32_0 : i32, i32
  }
  func.func @transform_5(%arg0: i32) -> (i32, i32) {
    %c0_i32 = arith.constant 0 : i32
    %c0_i32_0 = arith.constant 0 : i32
    %c0_i32_1 = arith.constant 0 : i32
    return %c0_i32, %c0_i32_0 : i32, i32
  }
  func.func @transform_6(%arg0: i32) -> (i32, i32) {
    %c0_i32 = arith.constant 0 : i32
    %c0_i32_0 = arith.constant 0 : i32
    %c0_i32_1 = arith.constant 0 : i32
    return %c0_i32, %c0_i32_0 : i32, i32
  }
  func.func @transform_7(%arg0: i32) -> (i32, i32) {
    %c0_i32 = arith.constant 0 : i32
    %c0_i32_0 = arith.constant 0 : i32
    %c0_i32_1 = arith.constant 0 : i32
    return %c0_i32, %c0_i32_0 : i32, i32
  }
  func.func @transform_8(%arg0: i32) -> (i32, i32) {
    %c0_i32 = arith.constant 0 : i32
    %c0_i32_0 = arith.constant 0 : i32
    %c0_i32_1 = arith.constant 0 : i32
    return %c0_i32, %c0_i32_0 : i32, i32
  }
  func.func @transform_9(%arg0: i32) -> (i32, i32) {
    %c0_i32 = arith.constant 0 : i32
    %c0_i32_0 = arith.constant 0 : i32
    %c0_i32_1 = arith.constant 0 : i32
    return %c0_i32, %c0_i32_0 : i32, i32
  }
  func.func @transform_10(%arg0: i32) -> (i32, i32) {
    %c0_i32 = arith.constant 0 : i32
    %c0_i32_0 = arith.constant 0 : i32
    %c0_i32_1 = arith.constant 0 : i32
    return %c0_i32, %c0_i32_0 : i32, i32
  }
  func.func @transform_11(%arg0: i32) -> (i32, i32) {
    %c0_i32 = arith.constant 0 : i32
    %c0_i32_0 = arith.constant 0 : i32
    %c0_i32_1 = arith.constant 0 : i32
    return %c0_i32, %c0_i32_0 : i32, i32
  }
  func.func @transform_12(%arg0: i32) -> (i32, i32) {
    %c0_i32 = arith.constant 0 : i32
    %c0_i32_0 = arith.constant 0 : i32
    %c0_i32_1 = arith.constant 0 : i32
    return %c0_i32, %c0_i32_0 : i32, i32
  }
  func.func @transform_13(%arg0: i32) -> (i32, i32) {
    %c0_i32 = arith.constant 0 : i32
    %c0_i32_0 = arith.constant 0 : i32
    return %arg0, %c0_i32 : i32, i32
  }
}

</mosaic_0001>

<llo_original>
// kernel: tpu_custom_call.1
$region0: #{tpu_custom_call.1}
  #allocation0 [shape = 'u32[]', space=smem, size = 0x4, offset = 0x4, fixed_abs, tag = 'smem constant byte address 0x4 - core index']
  #allocation1 [shape = 'u32[144,128]{1,0:T(1,128)}', space=vmem, size = 0x12000, scoped, tag = 'internal scratch']
  %s0 = inlined_call_operand.vmem [shape: f32[32,32], index: 0, kind: input, shape index: {}]
  %s1 = inlined_call_operand.hbm [shape: f32[32,32], index: 1, kind: input, shape index: {}]
  %s2 = inlined_call_operand.hbm [shape: f32[16,32], index: 2, kind: input, shape index: {}]
  %s3 = inlined_call_operand.hbm [shape: f32[16,32], index: 3, kind: input, shape index: {}]
  %s4 = inlined_call_operand.vmem [shape: f32[32,16], index: 4, kind: input, shape index: {}]
  %s5 = inlined_call_operand.vmem [shape: f32[32,32], index: 5, kind: input, shape index: {}]
  %s6 = inlined_call_operand.hbm [shape: f32[32,32], index: 6, kind: input, shape index: {}]
  %s7 = inlined_call_operand.hbm [shape: f32[32,32], index: 7, kind: input, shape index: {}]
  %s8 = inlined_call_operand.hbm [shape: f32[32,32], index: 8, kind: input, shape index: {}]
  %s9 = inlined_call_operand.vmem [shape: f32[1,32], index: 9, kind: input, shape index: {}]
  %s10 = inlined_call_operand.vmem [shape: f32[1,32], index: 10, kind: input, shape index: {}]
  %s11 = inlined_call_operand.vmem [shape: f32[1,32], index: 11, kind: input, shape index: {}]
  %s12 = inlined_call_operand.vmem [shape: f32[1,32], index: 12, kind: input, shape index: {}]
  %s13 = inlined_call_operand.hbm [shape: f32[32,32], index: 13, kind: output, shape index: {}]
  %s14 = sld [smem:[#allocation0]]
  $region86: #{tpu_custom_call.1} parent=0
    _
  %s16 = ssub.s32 1, %s14
  %s17 = scalar_select 0, %s16, %s14
  $region1: #{tpu_custom_call.1} parent=0
    #allocation2 [shape = 'u8[16384]{0}', space=vmem, size = 0x4000, scoped, tag = 'input window, operand 1, single buffered']
    #allocation3 [shape = 's32[1]{0}', space=sflag, size = 0x4, scoped, tag = 'scoped memory for tpu_custom_call.1']
    #allocation4 [shape = 's32[1]{0}', space=sflag, size = 0x4, scoped, tag = 'scoped memory for tpu_custom_call.1']
    #allocation5 [shape = 'u8[8192]{0}', space=vmem, size = 0x2000, scoped, tag = 'input window, operand 2, single buffered']
    #allocation6 [shape = 's32[1]{0}', space=sflag, size = 0x4, scoped, tag = 'scoped memory for tpu_custom_call.1']
    #allocation7 [shape = 'u8[8192]{0}', space=vmem, size = 0x2000, scoped, tag = 'input window, operand 3, single buffered']
    #allocation8 [shape = 'u8[16384]{0}', space=vmem, size = 0x4000, scoped, tag = 'input window, operand 6, single buffered']
    #allocation9 [shape = 's32[1]{0}', space=sflag, size = 0x4, scoped, tag = 'scoped memory for tpu_custom_call.1']
    #allocation10 [shape = 'u8[16384]{0}', space=vmem, size = 0x4000, scoped, tag = 'input window, operand 7, single buffered']
    #allocation11 [shape = 'u8[16384]{0}', space=vmem, size = 0x4000, scoped, tag = 'input window, operand 8, single buffered']
    #allocation12 [shape = 's32[1]{0}', space=sflag, size = 0x4, scoped, tag = 'scoped memory for tpu_custom_call.1']
    #allocation13 [shape = 'u8[16384]{0}', space=vmem, size = 0x4000, scoped, tag = 'output window, operand 0, single buffered']
    %18 = vsyncpa [#allocation3], 0
    %19 = vsyncpa [#allocation6], 0
    %20 = vsyncpa [#allocation9], 0
    %21 = vsyncpa [#allocation12], 0
    %22 = vsyncpa [#allocation4], 0
    // Predicated region
    $region2: #{tpu_custom_call.1} parent=1 // pred_check
      _
    $region3: #{tpu_custom_call.1} parent=1 // pred_check_branch
      %24 = sbr.rel (0) target = $region5
    $region4: #{tpu_custom_call.1} parent=1 // pred_region
      _
    $region5: #{tpu_custom_call.1} parent=1 // pred_fallthru
      _
    // Predicated region
    $region6: #{tpu_custom_call.1} parent=1 // pred_check
      _
    $region7: #{tpu_custom_call.1} parent=1 // pred_check_branch
      %26 = sbr.rel (0) target = $region9
    $region8: #{tpu_custom_call.1} parent=1 // pred_region
      %s28 = ssub.s32 512, 512
      %29 = vsyncadd [#allocation3], %s28
      %s30 = sshll.u32 [#allocation2], 4
      %s31 = int_to_ptr.vmem [resolvable:$true] %s30
      %36 = dma.hbm_to_vmem [thread:$0]  %s1, 512, %s31, [#allocation3], 128, 128, 8
    $region9: #{tpu_custom_call.1} parent=1 // pred_fallthru
      _
    // Predicated region
    $region10: #{tpu_custom_call.1} parent=1 // pred_check
      _
    $region11: #{tpu_custom_call.1} parent=1 // pred_check_branch
      %38 = sbr.rel (0) target = $region13
    $region12: #{tpu_custom_call.1} parent=1 // pred_region
      %s40 = ssub.s32 256, 256
      %41 = vsyncadd [#allocation6], %s40
      %s42 = sshll.u32 [#allocation5], 4
      %s43 = int_to_ptr.vmem [resolvable:$true] %s42
      %48 = dma.hbm_to_vmem [thread:$0]  %s2, 256, %s43, [#allocation6], 128, 128, 8
    $region13: #{tpu_custom_call.1} parent=1 // pred_fallthru
      _
    // Predicated region
    $region14: #{tpu_custom_call.1} parent=1 // pred_check
      _
    $region15: #{tpu_custom_call.1} parent=1 // pred_check_branch
      %50 = sbr.rel (0) target = $region17
    $region16: #{tpu_custom_call.1} parent=1 // pred_region
      %s52 = ssub.s32 256, 256
      %53 = vsyncadd [#allocation6], %s52
      %s54 = sshll.u32 [#allocation7], 4
      %s55 = int_to_ptr.vmem [resolvable:$true] %s54
      %60 = dma.hbm_to_vmem [thread:$0]  %s3, 256, %s55, [#allocation6], 128, 128, 8
    $region17: #{tpu_custom_call.1} parent=1 // pred_fallthru
      _
    // Predicated region
    $region18: #{tpu_custom_call.1} parent=1 // pred_check
      _
    $region19: #{tpu_custom_call.1} parent=1 // pred_check_branch
      %62 = sbr.rel (0) target = $region21
    $region20: #{tpu_custom_call.1} parent=1 // pred_region
      _
    $region21: #{tpu_custom_call.1} parent=1 // pred_fallthru
      _
    // Predicated region
    $region22: #{tpu_custom_call.1} parent=1 // pred_check
      _
    $region23: #{tpu_custom_call.1} parent=1 // pred_check_branch
      %64 = sbr.rel (0) target = $region25
    $region24: #{tpu_custom_call.1} parent=1 // pred_region
      _
    $region25: #{tpu_custom_call.1} parent=1 // pred_fallthru
      _
    // Predicated region
    $region26: #{tpu_custom_call.1} parent=1 // pred_check
      _
    $region27: #{tpu_custom_call.1} parent=1 // pred_check_branch
      %66 = sbr.rel (0) target = $region29
    $region28: #{tpu_custom_call.1} parent=1 // pred_region
      %s68 = ssub.s32 512, 512
      %69 = vsyncadd [#allocation9], %s68
      %s70 = sshll.u32 [#allocation8], 4
      %s71 = int_to_ptr.vmem [resolvable:$true] %s70
      %76 = dma.hbm_to_vmem [thread:$0]  %s6, 512, %s71, [#allocation9], 128, 128, 8
    $region29: #{tpu_custom_call.1} parent=1 // pred_fallthru
      _
    // Predicated region
    $region30: #{tpu_custom_call.1} parent=1 // pred_check
      _
    $region31: #{tpu_custom_call.1} parent=1 // pred_check_branch
      %78 = sbr.rel (0) target = $region33
    $region32: #{tpu_custom_call.1} parent=1 // pred_region
      %s80 = ssub.s32 512, 512
      %81 = vsyncadd [#allocation9], %s80
      %s82 = sshll.u32 [#allocation10], 4
      %s83 = int_to_ptr.vmem [resolvable:$true] %s82
      %88 = dma.hbm_to_vmem [thread:$0]  %s7, 512, %s83, [#allocation9], 128, 128, 8
    $region33: #{tpu_custom_call.1} parent=1 // pred_fallthru
      _
    // Predicated region
    $region34: #{tpu_custom_call.1} parent=1 // pred_check
      _
    $region35: #{tpu_custom_call.1} parent=1 // pred_check_branch
      %90 = sbr.rel (0) target = $region37
    $region36: #{tpu_custom_call.1} parent=1 // pred_region
      %s92 = ssub.s32 512, 512
      %93 = vsyncadd [#allocation12], %s92
      %s94 = sshll.u32 [#allocation11], 4
      %s95 = int_to_ptr.vmem [resolvable:$true] %s94
      %100 = dma.hbm_to_vmem [thread:$0]  %s8, 512, %s95, [#allocation12], 128, 128, 8
    $region37: #{tpu_custom_call.1} parent=1 // pred_fallthru
      _
    // Predicated region
    $region38: #{tpu_custom_call.1} parent=1 // pred_check
      _
    $region39: #{tpu_custom_call.1} parent=1 // pred_check_branch
      %102 = sbr.rel (0) target = $region41
    $region40: #{tpu_custom_call.1} parent=1 // pred_region
      _
    $region41: #{tpu_custom_call.1} parent=1 // pred_fallthru
      _
    // Predicated region
    $region42: #{tpu_custom_call.1} parent=1 // pred_check
      _
    $region43: #{tpu_custom_call.1} parent=1 // pred_check_branch
      %104 = sbr.rel (0) target = $region45
    $region44: #{tpu_custom_call.1} parent=1 // pred_region
      _
    $region45: #{tpu_custom_call.1} parent=1 // pred_fallthru
      _
    // Predicated region
    $region46: #{tpu_custom_call.1} parent=1 // pred_check
      _
    $region47: #{tpu_custom_call.1} parent=1 // pred_check_branch
      %106 = sbr.rel (0) target = $region49
    $region48: #{tpu_custom_call.1} parent=1 // pred_region
      _
    $region49: #{tpu_custom_call.1} parent=1 // pred_fallthru
      _
    // Predicated region
    $region50: #{tpu_custom_call.1} parent=1 // pred_check
      _
    $region51: #{tpu_custom_call.1} parent=1 // pred_check_branch
      %108 = sbr.rel (0) target = $region53
    $region52: #{tpu_custom_call.1} parent=1 // pred_region
      _
    $region53: #{tpu_custom_call.1} parent=1 // pred_fallthru
      _
    // Predicated region
    $region54: #{tpu_custom_call.1} parent=1 // pred_check
      _
    $region55: #{tpu_custom_call.1} parent=1 // pred_check_branch
      %110 = sbr.rel (0) target = $region57
    $region56: #{tpu_custom_call.1} parent=1 // pred_region
      %111 = dma.done [#allocation3], 512
    $region57: #{tpu_custom_call.1} parent=1 // pred_fallthru
      _
    // Predicated region
    $region58: #{tpu_custom_call.1} parent=1 // pred_check
      _
    $region59: #{tpu_custom_call.1} parent=1 // pred_check_branch
      %113 = sbr.rel (0) target = $region61
    $region60: #{tpu_custom_call.1} parent=1 // pred_region
      %114 = dma.done [#allocation6], 256
    $region61: #{tpu_custom_call.1} parent=1 // pred_fallthru
      _
    // Predicated region
    $region62: #{tpu_custom_call.1} parent=1 // pred_check
      _
    $region63: #{tpu_custom_call.1} parent=1 // pred_check_branch
      %116 = sbr.rel (0) target = $region65
    $region64: #{tpu_custom_call.1} parent=1 // pred_region
      %117 = dma.done [#allocation6], 256
    $region65: #{tpu_custom_call.1} parent=1 // pred_fallthru
      _
    // Predicated region
    $region66: #{tpu_custom_call.1} parent=1 // pred_check
      _
    $region67: #{tpu_custom_call.1} parent=1 // pred_check_branch
      %119 = sbr.rel (0) target = $region69
    $region68: #{tpu_custom_call.1} parent=1 // pred_region
      %120 = dma.done [#allocation9], 512
    $region69: #{tpu_custom_call.1} parent=1 // pred_fallthru
      _
    // Predicated region
    $region70: #{tpu_custom_call.1} parent=1 // pred_check
      _
    $region71: #{tpu_custom_call.1} parent=1 // pred_check_branch
      %122 = sbr.rel (0) target = $region73
    $region72: #{tpu_custom_call.1} parent=1 // pred_region
      %123 = dma.done [#allocation9], 512
    $region73: #{tpu_custom_call.1} parent=1 // pred_fallthru
      _
    // Predicated region
    $region74: #{tpu_custom_call.1} parent=1 // pred_check
      _
    $region75: #{tpu_custom_call.1} parent=1 // pred_check_branch
      %125 = sbr.rel (0) target = $region77
    $region76: #{tpu_custom_call.1} parent=1 // pred_region
      %126 = dma.done [#allocation12], 512
    $region77: #{tpu_custom_call.1} parent=1 // pred_fallthru
      _
    %v127 = vld [vmem:[%s0] sm:$0xff]
    %v128 = vld [vmem:[%s0 + $0x8] sm:$0xff]
    %v129 = vld [vmem:[%s0 + $0x10] sm:$0xff]
    %v130 = vld [vmem:[%s0 + $0x18] sm:$0xff]
    %v131 = vld [vmem:[#allocation2] sm:$0xff]
    %v132 = vld [vmem:[#allocation2 + $0x8] sm:$0xff]
    %v133 = vld [vmem:[#allocation2 + $0x10] sm:$0xff]
    %v134 = vld [vmem:[#allocation2 + $0x18] sm:$0xff]
    %v135 = vadd.f32 %v127, %v131
    %v136 = vadd.f32 %v128, %v132
    %v137 = vadd.f32 %v129, %v133
    %v138 = vadd.f32 %v130, %v134
    %v139 = vld [vmem:[#allocation5] sm:$0xff]
    %v140 = vld [vmem:[#allocation5 + $0x8] sm:$0xff]
    %v141 = vld [vmem:[#allocation7] sm:$0xff]
    %v142 = vld [vmem:[#allocation7 + $0x8] sm:$0xff]
    %v143 = vadd.f32 %v139, %v141
    %v144 = vadd.f32 %v140, %v142
    %v145 = vld [vmem:[%s5] sm:$0xff]
    %v146 = vld [vmem:[%s5 + $0x8] sm:$0xff]
    %v147 = vld [vmem:[%s5 + $0x10] sm:$0xff]
    %v148 = vld [vmem:[%s5 + $0x18] sm:$0xff]
    %v149 = vld [vmem:[%s9] sm:$0x1]
    %v151 = vlaneseq
    %v152 = vshrl.u32 %v151, 7
    %v153 = vsub.s32 0, %v152
    %v154 = vrot.slane %v149, %v153
    %vm156 = vcmask 261120
    %v158 = vsel %vm156, %v135, 0
    %v161 = vsel %vm156, %v136, 0
    %v164 = vsel %vm156, %v137, 0
    %v167 = vsel %vm156, %v138, 0
    %169 = vmatprep.subr.mxu0 0.0
    %170 = vmatpush1.msra.mxu0 %v145
    %171 = vmatprep.subr.mxu0 0.0
    %172 = vmatpush1.msra.mxu0 %v146
    %173 = vmatprep.subr.mxu0 0.0
    %174 = vmatpush1.msra.mxu0 %v147
    %175 = vmatprep.subr.mxu0 0.0
    %176 = vmatpush1.msra.mxu0 %v148
    %177 = vmatprep.subr.mxu0 0.0
    %178 = vmatpush1.msra.mxu0 0.0
    %179 = vmatprep.subr.mxu0 0.0
    %180 = vmatpush1.msra.mxu0 0.0
    %181 = vmatprep.subr.mxu0 0.0
    %182 = vmatpush1.msra.mxu0 0.0
    %183 = vmatprep.subr.mxu0 0.0
    %184 = vmatpush1.msra.mxu0 0.0
    %185 = vmatprep.subr.mxu0 0.0
    %186 = vmatpush1.msra.mxu0 0.0
    %187 = vmatprep.subr.mxu0 0.0
    %188 = vmatpush1.msra.mxu0 0.0
    %189 = vmatprep.subr.mxu0 0.0
    %190 = vmatpush1.msra.mxu0 0.0
    %191 = vmatprep.subr.mxu0 0.0
    %192 = vmatpush1.msra.mxu0 0.0
    %193 = vmatprep.subr.mxu0 0.0
    %194 = vmatpush1.msra.mxu0 0.0
    %195 = vmatprep.subr.mxu0 0.0
    %196 = vmatpush1.msra.mxu0 0.0
    %197 = vmatprep.subr.mxu0 0.0
    %198 = vmatpush1.msra.mxu0 0.0
    %199 = vmatprep.subr.mxu0 0.0
    %200 = vmatpush1.msra.mxu0 0.0
    %201 = vmatprep.subr.mxu0 0.0
    %202 = vmatpush1.msra.mxu0 0.0
    %203 = vmatprep.subr.mxu0 0.0
    %204 = vmatpush1.msra.mxu0 0.0
    %205 = vmatprep.subr.mxu0 0.0
    %206 = vmatpush1.msra.mxu0 0.0
    %207 = vmatprep.subr.mxu0 0.0
    %208 = vmatpush1.msra.mxu0 0.0
    %209 = vmatprep.subr.mxu0 0.0
    %210 = vmatpush1.msra.mxu0 0.0
    %211 = vmatprep.subr.mxu0 0.0
    %212 = vmatpush1.msra.mxu0 0.0
    %213 = vmatprep.subr.mxu0 0.0
    %214 = vmatpush1.msra.mxu0 0.0
    %215 = vmatprep.subr.mxu0 0.0
    %216 = vmatpush1.msra.mxu0 0.0
    %217 = vmatprep.subr.mxu0 0.0
    %218 = vmatpush1.msra.mxu0 0.0
    %219 = vmatprep.subr.mxu0 0.0
    %220 = vmatpush1.msra.mxu0 0.0
    %221 = vmatprep.subr.mxu0 0.0
    %222 = vmatpush1.msra.mxu0 0.0
    %223 = vmatprep.subr.mxu0 0.0
    %224 = vmatpush1.msra.mxu0 0.0
    %225 = vmatprep.subr.mxu0 0.0
    %226 = vmatpush1.msra.mxu0 0.0
    %227 = vmatprep.subr.mxu0 0.0
    %228 = vmatpush1.msra.mxu0 0.0
    %229 = vmatprep.subr.mxu0 0.0
    %230 = vmatpush1.msra.mxu0 0.0
    %231 = vmatprep.subr.mxu0 0.0
    %232 = vmatpush1.msra.mxu0 0.0
    %233 = vmatprep.mubr.f32.mxu0 0.0
    %234 = vmatmul.mubr.f32.gmra.mrb[0].mxu0 %v158
    %v235 = vpop.f32.mrb[0].mxu0
    %v236 = vadd.f32 %v154, %v235
    %v237 = vpop.f32.mrb[0].mxu0
    %238 = vmatprep.mubr.f32.mxu0 0.0
    %239 = vmatmul.mubr.f32.gmra.mrb[0].mxu0 %v161
    %v240 = vpop.f32.mrb[0].mxu0
    %v241 = vadd.f32 %v154, %v240
    %v242 = vpop.f32.mrb[0].mxu0
    %243 = vmatprep.mubr.f32.mxu0 0.0
    %244 = vmatmul.mubr.f32.gmra.mrb[0].mxu0 %v164
    %v245 = vpop.f32.mrb[0].mxu0
    %v246 = vadd.f32 %v154, %v245
    %v247 = vpop.f32.mrb[0].mxu0
    %248 = vmatprep.mubr.f32.mxu0 0.0
    %249 = vmatmul.mubr.f32.gmra.mrb[0].mxu0 %v167
    %v250 = vpop.f32.mrb[0].mxu0
    %v251 = vadd.f32 %v154, %v250
    %v252 = vpop.f32.mrb[0].mxu0
    %253 = vdwg.mxu0
    %v254 = vld [vmem:[#allocation8] sm:$0xff]
    %v255 = vld [vmem:[#allocation8 + $0x8] sm:$0xff]
    %v256 = vld [vmem:[#allocation8 + $0x10] sm:$0xff]
    %v257 = vld [vmem:[#allocation8 + $0x18] sm:$0xff]
    %v258 = vld [vmem:[%s10] sm:$0x1]
    %v260 = vlaneseq
    %v261 = vshrl.u32 %v260, 7
    %v262 = vsub.s32 0, %v261
    %v263 = vrot.slane %v258, %v262
    %v266 = vsel %vm156, %v143, 0
    %v269 = vsel %vm156, %v144, 0
    %271 = vmatprep.subr.mxu0 0.0
    %272 = vmatpush1.msra.mxu0 %v254
    %273 = vmatprep.subr.mxu0 0.0
    %274 = vmatpush1.msra.mxu0 %v255
    %275 = vmatprep.subr.mxu0 0.0
    %276 = vmatpush1.msra.mxu0 %v256
    %277 = vmatprep.subr.mxu0 0.0
    %278 = vmatpush1.msra.mxu0 %v257
    %279 = vmatprep.subr.mxu0 0.0
    %280 = vmatpush1.msra.mxu0 0.0
    %281 = vmatprep.subr.mxu0 0.0
    %282 = vmatpush1.msra.mxu0 0.0
    %283 = vmatprep.subr.mxu0 0.0
    %284 = vmatpush1.msra.mxu0 0.0
    %285 = vmatprep.subr.mxu0 0.0
    %286 = vmatpush1.msra.mxu0 0.0
    %287 = vmatprep.subr.mxu0 0.0
    %288 = vmatpush1.msra.mxu0 0.0
    %289 = vmatprep.subr.mxu0 0.0
    %290 = vmatpush1.msra.mxu0 0.0
    %291 = vmatprep.subr.mxu0 0.0
    %292 = vmatpush1.msra.mxu0 0.0
    %293 = vmatprep.subr.mxu0 0.0
    %294 = vmatpush1.msra.mxu0 0.0
    %295 = vmatprep.subr.mxu0 0.0
    %296 = vmatpush1.msra.mxu0 0.0
    %297 = vmatprep.subr.mxu0 0.0
    %298 = vmatpush1.msra.mxu0 0.0
    %299 = vmatprep.subr.mxu0 0.0
    %300 = vmatpush1.msra.mxu0 0.0
    %301 = vmatprep.subr.mxu0 0.0
    %302 = vmatpush1.msra.mxu0 0.0
    %303 = vmatprep.subr.mxu0 0.0
    %304 = vmatpush1.msra.mxu0 0.0
    %305 = vmatprep.subr.mxu0 0.0
    %306 = vmatpush1.msra.mxu0 0.0
    %307 = vmatprep.subr.mxu0 0.0
    %308 = vmatpush1.msra.mxu0 0.0
    %309 = vmatprep.subr.mxu0 0.0
    %310 = vmatpush1.msra.mxu0 0.0
    %311 = vmatprep.subr.mxu0 0.0
    %312 = vmatpush1.msra.mxu0 0.0
    %313 = vmatprep.subr.mxu0 0.0
    %314 = vmatpush1.msra.mxu0 0.0
    %315 = vmatprep.subr.mxu0 0.0
    %316 = vmatpush1.msra.mxu0 0.0
    %317 = vmatprep.subr.mxu0 0.0
    %318 = vmatpush1.msra.mxu0 0.0
    %319 = vmatprep.subr.mxu0 0.0
    %320 = vmatpush1.msra.mxu0 0.0
    %321 = vmatprep.subr.mxu0 0.0
    %322 = vmatpush1.msra.mxu0 0.0
    %323 = vmatprep.subr.mxu0 0.0
    %324 = vmatpush1.msra.mxu0 0.0
    %325 = vmatprep.subr.mxu0 0.0
    %326 = vmatpush1.msra.mxu0 0.0
    %327 = vmatprep.subr.mxu0 0.0
    %328 = vmatpush1.msra.mxu0 0.0
    %329 = vmatprep.subr.mxu0 0.0
    %330 = vmatpush1.msra.mxu0 0.0
    %331 = vmatprep.subr.mxu0 0.0
    %332 = vmatpush1.msra.mxu0 0.0
    %333 = vmatprep.subr.mxu0 0.0
    %334 = vmatpush1.msra.mxu0 0.0
    %335 = vmatprep.mubr.f32.mxu0 0.0
    %336 = vmatmul.mubr.f32.gmra.mrb[0].mxu0 %v266
    %v337 = vpop.f32.mrb[0].mxu0
    %v338 = vadd.f32 %v263, %v337
    %v339 = vpop.f32.mrb[0].mxu0
    %340 = vmatprep.mubr.f32.mxu0 0.0
    %341 = vmatmul.mubr.f32.gmra.mrb[0].mxu0 %v269
    %v342 = vpop.f32.mrb[0].mxu0
    %v343 = vadd.f32 %v263, %v342
    %v344 = vpop.f32.mrb[0].mxu0
    %345 = vdwg.mxu0
    %v346 = vld [vmem:[#allocation10] sm:$0xff]
    %v347 = vld [vmem:[#allocation10 + $0x8] sm:$0xff]
    %v348 = vld [vmem:[#allocation10 + $0x10] sm:$0xff]
    %v349 = vld [vmem:[#allocation10 + $0x18] sm:$0xff]
    %v350 = vld [vmem:[%s11] sm:$0x1]
    %v352 = vlaneseq
    %v353 = vshrl.u32 %v352, 7
    %v354 = vsub.s32 0, %v353
    %v355 = vrot.slane %v350, %v354
    %v358 = vsel %vm156, %v139, 0
    %v361 = vsel %vm156, %v140, 0
    %363 = vmatprep.subr.mxu0 0.0
    %364 = vmatpush1.msra.mxu0 %v346
    %365 = vmatprep.subr.mxu0 0.0
    %366 = vmatpush1.msra.mxu0 %v347
    %367 = vmatprep.subr.mxu0 0.0
    %368 = vmatpush1.msra.mxu0 %v348
    %369 = vmatprep.subr.mxu0 0.0
    %370 = vmatpush1.msra.mxu0 %v349
    %371 = vmatprep.subr.mxu0 0.0
    %372 = vmatpush1.msra.mxu0 0.0
    %373 = vmatprep.subr.mxu0 0.0
    %374 = vmatpush1.msra.mxu0 0.0
    %375 = vmatprep.subr.mxu0 0.0
    %376 = vmatpush1.msra.mxu0 0.0
    %377 = vmatprep.subr.mxu0 0.0
    %378 = vmatpush1.msra.mxu0 0.0
    %379 = vmatprep.subr.mxu0 0.0
    %380 = vmatpush1.msra.mxu0 0.0
    %381 = vmatprep.subr.mxu0 0.0
    %382 = vmatpush1.msra.mxu0 0.0
    %383 = vmatprep.subr.mxu0 0.0
    %384 = vmatpush1.msra.mxu0 0.0
    %385 = vmatprep.subr.mxu0 0.0
    %386 = vmatpush1.msra.mxu0 0.0
    %387 = vmatprep.subr.mxu0 0.0
    %388 = vmatpush1.msra.mxu0 0.0
    %389 = vmatprep.subr.mxu0 0.0
    %390 = vmatpush1.msra.mxu0 0.0
    %391 = vmatprep.subr.mxu0 0.0
    %392 = vmatpush1.msra.mxu0 0.0
    %393 = vmatprep.subr.mxu0 0.0
    %394 = vmatpush1.msra.mxu0 0.0
    %395 = vmatprep.subr.mxu0 0.0
    %396 = vmatpush1.msra.mxu0 0.0
    %397 = vmatprep.subr.mxu0 0.0
    %398 = vmatpush1.msra.mxu0 0.0
    %399 = vmatprep.subr.mxu0 0.0
    %400 = vmatpush1.msra.mxu0 0.0
    %401 = vmatprep.subr.mxu0 0.0
    %402 = vmatpush1.msra.mxu0 0.0
    %403 = vmatprep.subr.mxu0 0.0
    %404 = vmatpush1.msra.mxu0 0.0
    %405 = vmatprep.subr.mxu0 0.0
    %406 = vmatpush1.msra.mxu0 0.0
    %407 = vmatprep.subr.mxu0 0.0
    %408 = vmatpush1.msra.mxu0 0.0
    %409 = vmatprep.subr.mxu0 0.0
    %410 = vmatpush1.msra.mxu0 0.0
    %411 = vmatprep.subr.mxu0 0.0
    %412 = vmatpush1.msra.mxu0 0.0
    %413 = vmatprep.subr.mxu0 0.0
    %414 = vmatpush1.msra.mxu0 0.0
    %415 = vmatprep.subr.mxu0 0.0
    %416 = vmatpush1.msra.mxu0 0.0
    %417 = vmatprep.subr.mxu0 0.0
    %418 = vmatpush1.msra.mxu0 0.0
    %419 = vmatprep.subr.mxu0 0.0
    %420 = vmatpush1.msra.mxu0 0.0
    %421 = vmatprep.subr.mxu0 0.0
    %422 = vmatpush1.msra.mxu0 0.0
    %423 = vmatprep.subr.mxu0 0.0
    %424 = vmatpush1.msra.mxu0 0.0
    %425 = vmatprep.subr.mxu0 0.0
    %426 = vmatpush1.msra.mxu0 0.0
    %427 = vmatprep.mubr.f32.mxu0 0.0
    %428 = vmatmul.mubr.f32.gmra.mrb[0].mxu0 %v358
    %v429 = vpop.f32.mrb[0].mxu0
    %v430 = vadd.f32 %v355, %v429
    %v431 = vpop.f32.mrb[0].mxu0
    %432 = vmatprep.mubr.f32.mxu0 0.0
    %433 = vmatmul.mubr.f32.gmra.mrb[0].mxu0 %v361
    %v434 = vpop.f32.mrb[0].mxu0
    %v435 = vadd.f32 %v355, %v434
    %v436 = vpop.f32.mrb[0].mxu0
    %437 = vdwg.mxu0
    %v438 = vld [vmem:[%s4] sm:$0xff]
    %v439 = vld [vmem:[%s4 + $0x8] sm:$0xff]
    %v440 = vld [vmem:[%s4 + $0x10] sm:$0xff]
    %v441 = vld [vmem:[%s4 + $0x18] sm:$0xff]
    %vm442 = vcmask 64512
    %v444 = vsel %vm442, %v236, 0
    %v447 = vsel %vm442, %v241, 0
    %v450 = vsel %vm442, %v246, 0
    %v453 = vsel %vm442, %v251, 0
    %v456 = vsel %vm442, %v338, 0
    %v459 = vsel %vm442, %v343, 0
    %461 = vmatprep.subr.mxu0 0.0
    %462 = vmatpush1.xpose.msra.mxu0 %v456
    %463 = vmatprep.subr.mxu0 0.0
    %464 = vmatpush1.xpose.msra.mxu0 %v459
    %465 = vmatprep.subr.mxu0 0.0
    %466 = vmatpush1.xpose.msra.mxu0 0.0
    %467 = vmatprep.subr.mxu0 0.0
    %468 = vmatpush1.xpose.msra.mxu0 0.0
    %469 = vmatprep.subr.mxu0 0.0
    %470 = vmatpush1.xpose.msra.mxu0 0.0
    %471 = vmatprep.subr.mxu0 0.0
    %472 = vmatpush1.xpose.msra.mxu0 0.0
    %473 = vmatprep.subr.mxu0 0.0
    %474 = vmatpush1.xpose.msra.mxu0 0.0
    %475 = vmatprep.subr.mxu0 0.0
    %476 = vmatpush1.xpose.msra.mxu0 0.0
    %477 = vmatprep.subr.mxu0 0.0
    %478 = vmatpush1.xpose.msra.mxu0 0.0
    %479 = vmatprep.subr.mxu0 0.0
    %480 = vmatpush1.xpose.msra.mxu0 0.0
    %481 = vmatprep.subr.mxu0 0.0
    %482 = vmatpush1.xpose.msra.mxu0 0.0
    %483 = vmatprep.subr.mxu0 0.0
    %484 = vmatpush1.xpose.msra.mxu0 0.0
    %485 = vmatprep.subr.mxu0 0.0
    %486 = vmatpush1.xpose.msra.mxu0 0.0
    %487 = vmatprep.subr.mxu0 0.0
    %488 = vmatpush1.xpose.msra.mxu0 0.0
    %489 = vmatprep.subr.mxu0 0.0
    %490 = vmatpush1.xpose.msra.mxu0 0.0
    %491 = vmatprep.subr.mxu0 0.0
    %492 = vmatpush1.xpose.msra.mxu0 0.0
    %493 = vmatprep.subr.mxu0 0.0
    %494 = vmatpush1.xpose.msra.mxu0 0.0
    %495 = vmatprep.subr.mxu0 0.0
    %496 = vmatpush1.xpose.msra.mxu0 0.0
    %497 = vmatprep.subr.mxu0 0.0
    %498 = vmatpush1.xpose.msra.mxu0 0.0
    %499 = vmatprep.subr.mxu0 0.0
    %500 = vmatpush1.xpose.msra.mxu0 0.0
    %501 = vmatprep.subr.mxu0 0.0
    %502 = vmatpush1.xpose.msra.mxu0 0.0
    %503 = vmatprep.subr.mxu0 0.0
    %504 = vmatpush1.xpose.msra.mxu0 0.0
    %505 = vmatprep.subr.mxu0 0.0
    %506 = vmatpush1.xpose.msra.mxu0 0.0
    %507 = vmatprep.subr.mxu0 0.0
    %508 = vmatpush1.xpose.msra.mxu0 0.0
    %509 = vmatprep.subr.mxu0 0.0
    %510 = vmatpush1.xpose.msra.mxu0 0.0
    %511 = vmatprep.subr.mxu0 0.0
    %512 = vmatpush1.xpose.msra.mxu0 0.0
    %513 = vmatprep.subr.mxu0 0.0
    %514 = vmatpush1.xpose.msra.mxu0 0.0
    %515 = vmatprep.subr.mxu0 0.0
    %516 = vmatpush1.xpose.msra.mxu0 0.0
    %517 = vmatprep.subr.mxu0 0.0
    %518 = vmatpush1.xpose.msra.mxu0 0.0
    %519 = vmatprep.subr.mxu0 0.0
    %520 = vmatpush1.xpose.msra.mxu0 0.0
    %521 = vmatprep.subr.mxu0 0.0
    %522 = vmatpush1.xpose.msra.mxu0 0.0
    %523 = vmatprep.subr.mxu0 0.0
    %524 = vmatpush1.xpose.msra.mxu0 0.0
    %525 = vmatprep.mubr.f32.mxu0 0.0
    %526 = vmatmul.mubr.f32.gmra.mrb[0].mxu0 %v444
    %v527 = vpop.f32.mrb[0].mxu0
    %v528 = vadd.f32 %v438, %v527
    %v529 = vpop.f32.mrb[0].mxu0
    %530 = vmatprep.mubr.f32.mxu0 0.0
    %531 = vmatmul.mubr.f32.gmra.mrb[0].mxu0 %v447
    %v532 = vpop.f32.mrb[0].mxu0
    %v533 = vadd.f32 %v439, %v532
    %v534 = vpop.f32.mrb[0].mxu0
    %535 = vmatprep.mubr.f32.mxu0 0.0
    %536 = vmatmul.mubr.f32.gmra.mrb[0].mxu0 %v450
    %v537 = vpop.f32.mrb[0].mxu0
    %v538 = vadd.f32 %v440, %v537
    %v539 = vpop.f32.mrb[0].mxu0
    %540 = vmatprep.mubr.f32.mxu0 0.0
    %541 = vmatmul.mubr.f32.gmra.mrb[0].mxu0 %v453
    %v542 = vpop.f32.mrb[0].mxu0
    %v543 = vadd.f32 %v441, %v542
    %v544 = vpop.f32.mrb[0].mxu0
    %545 = vdwg.mxu0
    %vm546 = vcmask 130048
    %v547 = vsel %vm546, %v528, -inf
    %548 = vmax.xlane.f32.xlu0 %v547
    %v549 = vpop.xlane.xlu0 %548
    %v550 = vsel %vm546, %v533, -inf
    %551 = vmax.xlane.f32.xlu0 %v550
    %v552 = vpop.xlane.xlu0 %551
    %v553 = vsel %vm546, %v538, -inf
    %554 = vmax.xlane.f32.xlu0 %v553
    %v555 = vpop.xlane.xlu0 %554
    %v556 = vsel %vm546, %v543, -inf
    %557 = vmax.xlane.f32.xlu0 %v556
    %v558 = vpop.xlane.xlu0 %557
    %v559 = vsub.f32 %v528, %v549
    %v560 = vsub.f32 %v533, %v552
    %v561 = vsub.f32 %v538, %v555
    %v562 = vsub.f32 %v543, %v558
    %v563 = vmul.f32 %v559, 1.442695
    %v564 = vpow.pop %v563
    %v565 = vmul.f32 %v560, 1.442695
    %v566 = vpow.pop %v565
    %v567 = vmul.f32 %v561, 1.442695
    %v568 = vpow.pop %v567
    %v569 = vmul.f32 %v562, 1.442695
    %v570 = vpow.pop %v569
    %v571 = vsel %vm546, %v564, 0.0
    %572 = vadd.xlane.f32.xlu0 %v571
    %v573 = vpop.xlane.xlu0 %572
    %v574 = vsel %vm546, %v566, 0.0
    %575 = vadd.xlane.f32.xlu0 %v574
    %v576 = vpop.xlane.xlu0 %575
    %v577 = vsel %vm546, %v568, 0.0
    %578 = vadd.xlane.f32.xlu0 %v577
    %v579 = vpop.xlane.xlu0 %578
    %v580 = vsel %vm546, %v570, 0.0
    %581 = vadd.xlane.f32.xlu0 %v580
    %v582 = vpop.xlane.xlu0 %581
    %v584 = vsel %vm546, %v564, 0
    %v587 = vsel %vm546, %v566, 0
    %v590 = vsel %vm546, %v568, 0
    %v593 = vsel %vm546, %v570, 0
    %595 = vmatprep.subr.mxu0 0.0
    %596 = vmatpush1.msra.mxu0 %v430
    %597 = vmatprep.subr.mxu0 0.0
    %598 = vmatpush1.msra.mxu0 %v435
    %599 = vmatprep.subr.mxu0 0.0
    %600 = vmatpush1.msra.mxu0 0.0
    %601 = vmatprep.subr.mxu0 0.0
    %602 = vmatpush1.msra.mxu0 0.0
    %603 = vmatprep.subr.mxu0 0.0
    %604 = vmatpush1.msra.mxu0 0.0
    %605 = vmatprep.subr.mxu0 0.0
    %606 = vmatpush1.msra.mxu0 0.0
    %607 = vmatprep.subr.mxu0 0.0
    %608 = vmatpush1.msra.mxu0 0.0
    %609 = vmatprep.subr.mxu0 0.0
    %610 = vmatpush1.msra.mxu0 0.0
    %611 = vmatprep.subr.mxu0 0.0
    %612 = vmatpush1.msra.mxu0 0.0
    %613 = vmatprep.subr.mxu0 0.0
    %614 = vmatpush1.msra.mxu0 0.0
    %615 = vmatprep.subr.mxu0 0.0
    %616 = vmatpush1.msra.mxu0 0.0
    %617 = vmatprep.subr.mxu0 0.0
    %618 = vmatpush1.msra.mxu0 0.0
    %619 = vmatprep.subr.mxu0 0.0
    %620 = vmatpush1.msra.mxu0 0.0
    %621 = vmatprep.subr.mxu0 0.0
    %622 = vmatpush1.msra.mxu0 0.0
    %623 = vmatprep.subr.mxu0 0.0
    %624 = vmatpush1.msra.mxu0 0.0
    %625 = vmatprep.subr.mxu0 0.0
    %626 = vmatpush1.msra.mxu0 0.0
    %627 = vmatprep.subr.mxu0 0.0
    %628 = vmatpush1.msra.mxu0 0.0
    %629 = vmatprep.subr.mxu0 0.0
    %630 = vmatpush1.msra.mxu0 0.0
    %631 = vmatprep.subr.mxu0 0.0
    %632 = vmatpush1.msra.mxu0 0.0
    %633 = vmatprep.subr.mxu0 0.0
    %634 = vmatpush1.msra.mxu0 0.0
    %635 = vmatprep.subr.mxu0 0.0
    %636 = vmatpush1.msra.mxu0 0.0
    %637 = vmatprep.subr.mxu0 0.0
    %638 = vmatpush1.msra.mxu0 0.0
    %639 = vmatprep.subr.mxu0 0.0
    %640 = vmatpush1.msra.mxu0 0.0
    %641 = vmatprep.subr.mxu0 0.0
    %642 = vmatpush1.msra.mxu0 0.0
    %643 = vmatprep.subr.mxu0 0.0
    %644 = vmatpush1.msra.mxu0 0.0
    %645 = vmatprep.subr.mxu0 0.0
    %646 = vmatpush1.msra.mxu0 0.0
    %647 = vmatprep.subr.mxu0 0.0
    %648 = vmatpush1.msra.mxu0 0.0
    %649 = vmatprep.subr.mxu0 0.0
    %650 = vmatpush1.msra.mxu0 0.0
    %651 = vmatprep.subr.mxu0 0.0
    %652 = vmatpush1.msra.mxu0 0.0
    %653 = vmatprep.subr.mxu0 0.0
    %654 = vmatpush1.msra.mxu0 0.0
    %655 = vmatprep.subr.mxu0 0.0
    %656 = vmatpush1.msra.mxu0 0.0
    %657 = vmatprep.subr.mxu0 0.0
    %658 = vmatpush1.msra.mxu0 0.0
    %659 = vmatprep.mubr.f32.mxu0 0.0
    %660 = vmatmul.mubr.f32.gmra.mrb[0].mxu0 %v584
    %v661 = vpop.f32.mrb[0].mxu0
    %v662 = vadd.f32 0.0, %v661
    %v663 = vpop.f32.mrb[0].mxu0
    %664 = vmatprep.mubr.f32.mxu0 0.0
    %665 = vmatmul.mubr.f32.gmra.mrb[0].mxu0 %v587
    %v666 = vpop.f32.mrb[0].mxu0
    %v667 = vadd.f32 0.0, %v666
    %v668 = vpop.f32.mrb[0].mxu0
    %669 = vmatprep.mubr.f32.mxu0 0.0
    %670 = vmatmul.mubr.f32.gmra.mrb[0].mxu0 %v590
    %v671 = vpop.f32.mrb[0].mxu0
    %v672 = vadd.f32 0.0, %v671
    %v673 = vpop.f32.mrb[0].mxu0
    %674 = vmatprep.mubr.f32.mxu0 0.0
    %675 = vmatmul.mubr.f32.gmra.mrb[0].mxu0 %v593
    %v676 = vpop.f32.mrb[0].mxu0
    %v677 = vadd.f32 0.0, %v676
    %v678 = vpop.f32.mrb[0].mxu0
    %679 = vdwg.mxu0
    %v680 = vrcp.pop %v573
    %v681 = vrcp.pop %v576
    %v682 = vrcp.pop %v579
    %v683 = vrcp.pop %v582
    %v684 = vmul.f32 %v662, %v680
    %v685 = vmul.f32 %v667, %v681
    %v686 = vmul.f32 %v672, %v682
    %v687 = vmul.f32 %v677, %v683
    %688 = vrot.lane.b32.xlu0 %v236, 120
    %v689 = vpop.permute.xlu0 %688
    %690 = vrot.lane.b32.xlu0 %v241, 120
    %v691 = vpop.permute.xlu0 %690
    %692 = vrot.lane.b32.xlu0 %v246, 120
    %v693 = vpop.permute.xlu0 %692
    %694 = vrot.lane.b32.xlu0 %v251, 120
    %v695 = vpop.permute.xlu0 %694
    %696 = vrot.lane.b32.xlu0 %v338, 120
    %v697 = vpop.permute.xlu0 %696
    %698 = vrot.lane.b32.xlu0 %v343, 120
    %v699 = vpop.permute.xlu0 %698
    %v700 = vsel %vm442, %v689, 0
    %v702 = vsel %vm442, %v691, 0
    %v704 = vsel %vm442, %v693, 0
    %v706 = vsel %vm442, %v695, 0
    %v708 = vsel %vm442, %v697, 0
    %v710 = vsel %vm442, %v699, 0
    %712 = vmatprep.subr.mxu0 0.0
    %713 = vmatpush1.xpose.msra.mxu0 %v708
    %714 = vmatprep.subr.mxu0 0.0
    %715 = vmatpush1.xpose.msra.mxu0 %v710
    %716 = vmatprep.subr.mxu0 0.0
    %717 = vmatpush1.xpose.msra.mxu0 0.0
    %718 = vmatprep.subr.mxu0 0.0
    %719 = vmatpush1.xpose.msra.mxu0 0.0
    %720 = vmatprep.subr.mxu0 0.0
    %721 = vmatpush1.xpose.msra.mxu0 0.0
    %722 = vmatprep.subr.mxu0 0.0
    %723 = vmatpush1.xpose.msra.mxu0 0.0
    %724 = vmatprep.subr.mxu0 0.0
    %725 = vmatpush1.xpose.msra.mxu0 0.0
    %726 = vmatprep.subr.mxu0 0.0
    %727 = vmatpush1.xpose.msra.mxu0 0.0
    %728 = vmatprep.subr.mxu0 0.0
    %729 = vmatpush1.xpose.msra.mxu0 0.0
    %730 = vmatprep.subr.mxu0 0.0
    %731 = vmatpush1.xpose.msra.mxu0 0.0
    %732 = vmatprep.subr.mxu0 0.0
    %733 = vmatpush1.xpose.msra.mxu0 0.0
    %734 = vmatprep.subr.mxu0 0.0
    %735 = vmatpush1.xpose.msra.mxu0 0.0
    %736 = vmatprep.subr.mxu0 0.0
    %737 = vmatpush1.xpose.msra.mxu0 0.0
    %738 = vmatprep.subr.mxu0 0.0
    %739 = vmatpush1.xpose.msra.mxu0 0.0
    %740 = vmatprep.subr.mxu0 0.0
    %741 = vmatpush1.xpose.msra.mxu0 0.0
    %742 = vmatprep.subr.mxu0 0.0
    %743 = vmatpush1.xpose.msra.mxu0 0.0
    %744 = vmatprep.subr.mxu0 0.0
    %745 = vmatpush1.xpose.msra.mxu0 0.0
    %746 = vmatprep.subr.mxu0 0.0
    %747 = vmatpush1.xpose.msra.mxu0 0.0
    %748 = vmatprep.subr.mxu0 0.0
    %749 = vmatpush1.xpose.msra.mxu0 0.0
    %750 = vmatprep.subr.mxu0 0.0
    %751 = vmatpush1.xpose.msra.mxu0 0.0
    %752 = vmatprep.subr.mxu0 0.0
    %753 = vmatpush1.xpose.msra.mxu0 0.0
    %754 = vmatprep.subr.mxu0 0.0
    %755 = vmatpush1.xpose.msra.mxu0 0.0
    %756 = vmatprep.subr.mxu0 0.0
    %757 = vmatpush1.xpose.msra.mxu0 0.0
    %758 = vmatprep.subr.mxu0 0.0
    %759 = vmatpush1.xpose.msra.mxu0 0.0
    %760 = vmatprep.subr.mxu0 0.0
    %761 = vmatpush1.xpose.msra.mxu0 0.0
    %762 = vmatprep.subr.mxu0 0.0
    %763 = vmatpush1.xpose.msra.mxu0 0.0
    %764 = vmatprep.subr.mxu0 0.0
    %765 = vmatpush1.xpose.msra.mxu0 0.0
    %766 = vmatprep.subr.mxu0 0.0
    %767 = vmatpush1.xpose.msra.mxu0 0.0
    %768 = vmatprep.subr.mxu0 0.0
    %769 = vmatpush1.xpose.msra.mxu0 0.0
    %770 = vmatprep.subr.mxu0 0.0
    %771 = vmatpush1.xpose.msra.mxu0 0.0
    %772 = vmatprep.subr.mxu0 0.0
    %773 = vmatpush1.xpose.msra.mxu0 0.0
    %774 = vmatprep.subr.mxu0 0.0
    %775 = vmatpush1.xpose.msra.mxu0 0.0
    %776 = vmatprep.mubr.f32.mxu0 0.0
    %777 = vmatmul.mubr.f32.gmra.mrb[0].mxu0 %v700
    %v778 = vpop.f32.mrb[0].mxu0
    %v779 = vadd.f32 %v438, %v778
    %v780 = vpop.f32.mrb[0].mxu0
    %781 = vmatprep.mubr.f32.mxu0 0.0
    %782 = vmatmul.mubr.f32.gmra.mrb[0].mxu0 %v702
    %v783 = vpop.f32.mrb[0].mxu0
    %v784 = vadd.f32 %v439, %v783
    %v785 = vpop.f32.mrb[0].mxu0
    %786 = vmatprep.mubr.f32.mxu0 0.0
    %787 = vmatmul.mubr.f32.gmra.mrb[0].mxu0 %v704
    %v788 = vpop.f32.mrb[0].mxu0
    %v789 = vadd.f32 %v440, %v788
    %v790 = vpop.f32.mrb[0].mxu0
    %791 = vmatprep.mubr.f32.mxu0 0.0
    %792 = vmatmul.mubr.f32.gmra.mrb[0].mxu0 %v706
    %v793 = vpop.f32.mrb[0].mxu0
    %v794 = vadd.f32 %v441, %v793
    %v795 = vpop.f32.mrb[0].mxu0
    %796 = vdwg.mxu0
    %v797 = vsel %vm546, %v779, -inf
    %798 = vmax.xlane.f32.xlu0 %v797
    %v799 = vpop.xlane.xlu0 %798
    %v800 = vsel %vm546, %v784, -inf
    %801 = vmax.xlane.f32.xlu0 %v800
    %v802 = vpop.xlane.xlu0 %801
    %v803 = vsel %vm546, %v789, -inf
    %804 = vmax.xlane.f32.xlu0 %v803
    %v805 = vpop.xlane.xlu0 %804
    %v806 = vsel %vm546, %v794, -inf
    %807 = vmax.xlane.f32.xlu0 %v806
    %v808 = vpop.xlane.xlu0 %807
    %v809 = vsub.f32 %v779, %v799
    %v810 = vsub.f32 %v784, %v802
    %v811 = vsub.f32 %v789, %v805
    %v812 = vsub.f32 %v794, %v808
    %v813 = vmul.f32 %v809, 1.442695
    %v814 = vpow.pop %v813
    %v815 = vmul.f32 %v810, 1.442695
    %v816 = vpow.pop %v815
    %v817 = vmul.f32 %v811, 1.442695
    %v818 = vpow.pop %v817
    %v819 = vmul.f32 %v812, 1.442695
    %v820 = vpow.pop %v819
    %v821 = vsel %vm546, %v814, 0.0
    %822 = vadd.xlane.f32.xlu0 %v821
    %v823 = vpop.xlane.xlu0 %822
    %v824 = vsel %vm546, %v816, 0.0
    %825 = vadd.xlane.f32.xlu0 %v824
    %v826 = vpop.xlane.xlu0 %825
    %v827 = vsel %vm546, %v818, 0.0
    %828 = vadd.xlane.f32.xlu0 %v827
    %v829 = vpop.xlane.xlu0 %828
    %v830 = vsel %vm546, %v820, 0.0
    %831 = vadd.xlane.f32.xlu0 %v830
    %v832 = vpop.xlane.xlu0 %831
    %835 = vrot.lane.b32.xlu0 %v430, 120
    %v836 = vpop.permute.xlu0 %835
    %837 = vrot.lane.b32.xlu0 %v435, 120
    %v838 = vpop.permute.xlu0 %837
    %v842 = vsel %vm546, %v814, 0
    %v845 = vsel %vm546, %v816, 0
    %v848 = vsel %vm546, %v818, 0
    %v851 = vsel %vm546, %v820, 0
    %853 = vmatprep.subr.mxu0 0.0
    %854 = vmatpush1.msra.mxu0 %v836
    %855 = vmatprep.subr.mxu0 0.0
    %856 = vmatpush1.msra.mxu0 %v838
    %857 = vmatprep.subr.mxu0 0.0
    %858 = vmatpush1.msra.mxu0 0.0
    %859 = vmatprep.subr.mxu0 0.0
    %860 = vmatpush1.msra.mxu0 0.0
    %861 = vmatprep.subr.mxu0 0.0
    %862 = vmatpush1.msra.mxu0 0.0
    %863 = vmatprep.subr.mxu0 0.0
    %864 = vmatpush1.msra.mxu0 0.0
    %865 = vmatprep.subr.mxu0 0.0
    %866 = vmatpush1.msra.mxu0 0.0
    %867 = vmatprep.subr.mxu0 0.0
    %868 = vmatpush1.msra.mxu0 0.0
    %869 = vmatprep.subr.mxu0 0.0
    %870 = vmatpush1.msra.mxu0 0.0
    %871 = vmatprep.subr.mxu0 0.0
    %872 = vmatpush1.msra.mxu0 0.0
    %873 = vmatprep.subr.mxu0 0.0
    %874 = vmatpush1.msra.mxu0 0.0
    %875 = vmatprep.subr.mxu0 0.0
    %876 = vmatpush1.msra.mxu0 0.0
    %877 = vmatprep.subr.mxu0 0.0
    %878 = vmatpush1.msra.mxu0 0.0
    %879 = vmatprep.subr.mxu0 0.0
    %880 = vmatpush1.msra.mxu0 0.0
    %881 = vmatprep.subr.mxu0 0.0
    %882 = vmatpush1.msra.mxu0 0.0
    %883 = vmatprep.subr.mxu0 0.0
    %884 = vmatpush1.msra.mxu0 0.0
    %885 = vmatprep.subr.mxu0 0.0
    %886 = vmatpush1.msra.mxu0 0.0
    %887 = vmatprep.subr.mxu0 0.0
    %888 = vmatpush1.msra.mxu0 0.0
    %889 = vmatprep.subr.mxu0 0.0
    %890 = vmatpush1.msra.mxu0 0.0
    %891 = vmatprep.subr.mxu0 0.0
    %892 = vmatpush1.msra.mxu0 0.0
    %893 = vmatprep.subr.mxu0 0.0
    %894 = vmatpush1.msra.mxu0 0.0
    %895 = vmatprep.subr.mxu0 0.0
    %896 = vmatpush1.msra.mxu0 0.0
    %897 = vmatprep.subr.mxu0 0.0
    %898 = vmatpush1.msra.mxu0 0.0
    %899 = vmatprep.subr.mxu0 0.0
    %900 = vmatpush1.msra.mxu0 0.0
    %901 = vmatprep.subr.mxu0 0.0
    %902 = vmatpush1.msra.mxu0 0.0
    %903 = vmatprep.subr.mxu0 0.0
    %904 = vmatpush1.msra.mxu0 0.0
    %905 = vmatprep.subr.mxu0 0.0
    %906 = vmatpush1.msra.mxu0 0.0
    %907 = vmatprep.subr.mxu0 0.0
    %908 = vmatpush1.msra.mxu0 0.0
    %909 = vmatprep.subr.mxu0 0.0
    %910 = vmatpush1.msra.mxu0 0.0
    %911 = vmatprep.subr.mxu0 0.0
    %912 = vmatpush1.msra.mxu0 0.0
    %913 = vmatprep.subr.mxu0 0.0
    %914 = vmatpush1.msra.mxu0 0.0
    %915 = vmatprep.subr.mxu0 0.0
    %916 = vmatpush1.msra.mxu0 0.0
    %917 = vmatprep.mubr.f32.mxu0 0.0
    %918 = vmatmul.mubr.f32.gmra.mrb[0].mxu0 %v842
    %v919 = vpop.f32.mrb[0].mxu0
    %v920 = vadd.f32 0.0, %v919
    %v921 = vpop.f32.mrb[0].mxu0
    %922 = vmatprep.mubr.f32.mxu0 0.0
    %923 = vmatmul.mubr.f32.gmra.mrb[0].mxu0 %v845
    %v924 = vpop.f32.mrb[0].mxu0
    %v925 = vadd.f32 0.0, %v924
    %v926 = vpop.f32.mrb[0].mxu0
    %927 = vmatprep.mubr.f32.mxu0 0.0
    %928 = vmatmul.mubr.f32.gmra.mrb[0].mxu0 %v848
    %v929 = vpop.f32.mrb[0].mxu0
    %v930 = vadd.f32 0.0, %v929
    %v931 = vpop.f32.mrb[0].mxu0
    %932 = vmatprep.mubr.f32.mxu0 0.0
    %933 = vmatmul.mubr.f32.gmra.mrb[0].mxu0 %v851
    %v934 = vpop.f32.mrb[0].mxu0
    %v935 = vadd.f32 0.0, %v934
    %v936 = vpop.f32.mrb[0].mxu0
    %937 = vdwg.mxu0
    %v938 = vrcp.pop %v823
    %v939 = vrcp.pop %v826
    %v940 = vrcp.pop %v829
    %v941 = vrcp.pop %v832
    %v942 = vmul.f32 %v920, %v938
    %v943 = vmul.f32 %v925, %v939
    %v944 = vmul.f32 %v930, %v940
    %v945 = vmul.f32 %v935, %v941
    %946 = vrot.lane.b32.xlu0 %v236, 112
    %v947 = vpop.permute.xlu0 %946
    %948 = vrot.lane.b32.xlu0 %v241, 112
    %v949 = vpop.permute.xlu0 %948
    %950 = vrot.lane.b32.xlu0 %v246, 112
    %v951 = vpop.permute.xlu0 %950
    %952 = vrot.lane.b32.xlu0 %v251, 112
    %v953 = vpop.permute.xlu0 %952
    %954 = vrot.lane.b32.xlu0 %v338, 112
    %v955 = vpop.permute.xlu0 %954
    %956 = vrot.lane.b32.xlu0 %v343, 112
    %v957 = vpop.permute.xlu0 %956
    %v958 = vsel %vm442, %v947, 0
    %v960 = vsel %vm442, %v949, 0
    %v962 = vsel %vm442, %v951, 0
    %v964 = vsel %vm442, %v953, 0
    %v966 = vsel %vm442, %v955, 0
    %v968 = vsel %vm442, %v957, 0
    %970 = vmatprep.subr.mxu0 0.0
    %971 = vmatpush1.xpose.msra.mxu0 %v966
    %972 = vmatprep.subr.mxu0 0.0
    %973 = vmatpush1.xpose.msra.mxu0 %v968
    %974 = vmatprep.subr.mxu0 0.0
    %975 = vmatpush1.xpose.msra.mxu0 0.0
    %976 = vmatprep.subr.mxu0 0.0
    %977 = vmatpush1.xpose.msra.mxu0 0.0
    %978 = vmatprep.subr.mxu0 0.0
    %979 = vmatpush1.xpose.msra.mxu0 0.0
    %980 = vmatprep.subr.mxu0 0.0
    %981 = vmatpush1.xpose.msra.mxu0 0.0
    %982 = vmatprep.subr.mxu0 0.0
    %983 = vmatpush1.xpose.msra.mxu0 0.0
    %984 = vmatprep.subr.mxu0 0.0
    %985 = vmatpush1.xpose.msra.mxu0 0.0
    %986 = vmatprep.subr.mxu0 0.0
    %987 = vmatpush1.xpose.msra.mxu0 0.0
    %988 = vmatprep.subr.mxu0 0.0
    %989 = vmatpush1.xpose.msra.mxu0 0.0
    %990 = vmatprep.subr.mxu0 0.0
    %991 = vmatpush1.xpose.msra.mxu0 0.0
    %992 = vmatprep.subr.mxu0 0.0
    %993 = vmatpush1.xpose.msra.mxu0 0.0
    %994 = vmatprep.subr.mxu0 0.0
    %995 = vmatpush1.xpose.msra.mxu0 0.0
    %996 = vmatprep.subr.mxu0 0.0
    %997 = vmatpush1.xpose.msra.mxu0 0.0
    %998 = vmatprep.subr.mxu0 0.0
    %999 = vmatpush1.xpose.msra.mxu0 0.0
    %1000 = vmatprep.subr.mxu0 0.0
    %1001 = vmatpush1.xpose.msra.mxu0 0.0
    %1002 = vmatprep.subr.mxu0 0.0
    %1003 = vmatpush1.xpose.msra.mxu0 0.0
    %1004 = vmatprep.subr.mxu0 0.0
    %1005 = vmatpush1.xpose.msra.mxu0 0.0
    %1006 = vmatprep.subr.mxu0 0.0
    %1007 = vmatpush1.xpose.msra.mxu0 0.0
    %1008 = vmatprep.subr.mxu0 0.0
    %1009 = vmatpush1.xpose.msra.mxu0 0.0
    %1010 = vmatprep.subr.mxu0 0.0
    %1011 = vmatpush1.xpose.msra.mxu0 0.0
    %1012 = vmatprep.subr.mxu0 0.0
    %1013 = vmatpush1.xpose.msra.mxu0 0.0
    %1014 = vmatprep.subr.mxu0 0.0
    %1015 = vmatpush1.xpose.msra.mxu0 0.0
    %1016 = vmatprep.subr.mxu0 0.0
    %1017 = vmatpush1.xpose.msra.mxu0 0.0
    %1018 = vmatprep.subr.mxu0 0.0
    %1019 = vmatpush1.xpose.msra.mxu0 0.0
    %1020 = vmatprep.subr.mxu0 0.0
    %1021 = vmatpush1.xpose.msra.mxu0 0.0
    %1022 = vmatprep.subr.mxu0 0.0
    %1023 = vmatpush1.xpose.msra.mxu0 0.0
    %1024 = vmatprep.subr.mxu0 0.0
    %1025 = vmatpush1.xpose.msra.mxu0 0.0
    %1026 = vmatprep.subr.mxu0 0.0
    %1027 = vmatpush1.xpose.msra.mxu0 0.0
    %1028 = vmatprep.subr.mxu0 0.0
    %1029 = vmatpush1.xpose.msra.mxu0 0.0
    %1030 = vmatprep.subr.mxu0 0.0
    %1031 = vmatpush1.xpose.msra.mxu0 0.0
    %1032 = vmatprep.subr.mxu0 0.0
    %1033 = vmatpush1.xpose.msra.mxu0 0.0
    %1034 = vmatprep.mubr.f32.mxu0 0.0
    %1035 = vmatmul.mubr.f32.gmra.mrb[0].mxu0 %v958
    %v1036 = vpop.f32.mrb[0].mxu0
    %v1037 = vadd.f32 %v438, %v1036
    %v1038 = vpop.f32.mrb[0].mxu0
    %1039 = vmatprep.mubr.f32.mxu0 0.0
    %1040 = vmatmul.mubr.f32.gmra.mrb[0].mxu0 %v960
    %v1041 = vpop.f32.mrb[0].mxu0
    %v1042 = vadd.f32 %v439, %v1041
    %v1043 = vpop.f32.mrb[0].mxu0
    %1044 = vmatprep.mubr.f32.mxu0 0.0
    %1045 = vmatmul.mubr.f32.gmra.mrb[0].mxu0 %v962
    %v1046 = vpop.f32.mrb[0].mxu0
    %v1047 = vadd.f32 %v440, %v1046
    %v1048 = vpop.f32.mrb[0].mxu0
    %1049 = vmatprep.mubr.f32.mxu0 0.0
    %1050 = vmatmul.mubr.f32.gmra.mrb[0].mxu0 %v964
    %v1051 = vpop.f32.mrb[0].mxu0
    %v1052 = vadd.f32 %v441, %v1051
    %v1053 = vpop.f32.mrb[0].mxu0
    %1054 = vdwg.mxu0
    %v1055 = vsel %vm546, %v1037, -inf
    %1056 = vmax.xlane.f32.xlu0 %v1055
    %v1057 = vpop.xlane.xlu0 %1056
    %v1058 = vsel %vm546, %v1042, -inf
    %1059 = vmax.xlane.f32.xlu0 %v1058
    %v1060 = vpop.xlane.xlu0 %1059
    %v1061 = vsel %vm546, %v1047, -inf
    %1062 = vmax.xlane.f32.xlu0 %v1061
    %v1063 = vpop.xlane.xlu0 %1062
    %v1064 = vsel %vm546, %v1052, -inf
    %1065 = vmax.xlane.f32.xlu0 %v1064
    %v1066 = vpop.xlane.xlu0 %1065
    %v1067 = vsub.f32 %v1037, %v1057
    %v1068 = vsub.f32 %v1042, %v1060
    %v1069 = vsub.f32 %v1047, %v1063
    %v1070 = vsub.f32 %v1052, %v1066
    %v1071 = vmul.f32 %v1067, 1.442695
    %v1072 = vpow.pop %v1071
    %v1073 = vmul.f32 %v1068, 1.442695
    %v1074 = vpow.pop %v1073
    %v1075 = vmul.f32 %v1069, 1.442695
    %v1076 = vpow.pop %v1075
    %v1077 = vmul.f32 %v1070, 1.442695
    %v1078 = vpow.pop %v1077
    %v1079 = vsel %vm546, %v1072, 0.0
    %1080 = vadd.xlane.f32.xlu0 %v1079
    %v1081 = vpop.xlane.xlu0 %1080
    %v1082 = vsel %vm546, %v1074, 0.0
    %1083 = vadd.xlane.f32.xlu0 %v1082
    %v1084 = vpop.xlane.xlu0 %1083
    %v1085 = vsel %vm546, %v1076, 0.0
    %1086 = vadd.xlane.f32.xlu0 %v1085
    %v1087 = vpop.xlane.xlu0 %1086
    %v1088 = vsel %vm546, %v1078, 0.0
    %1089 = vadd.xlane.f32.xlu0 %v1088
    %v1090 = vpop.xlane.xlu0 %1089
    %1091 = vrot.lane.b32.xlu0 %v430, 112
    %v1092 = vpop.permute.xlu0 %1091
    %1093 = vrot.lane.b32.xlu0 %v435, 112
    %v1094 = vpop.permute.xlu0 %1093
    %v1098 = vsel %vm546, %v1072, 0
    %v1101 = vsel %vm546, %v1074, 0
    %v1104 = vsel %vm546, %v1076, 0
    %v1107 = vsel %vm546, %v1078, 0
    %1109 = vmatprep.subr.mxu0 0.0
    %1110 = vmatpush1.msra.mxu0 %v1092
    %1111 = vmatprep.subr.mxu0 0.0
    %1112 = vmatpush1.msra.mxu0 %v1094
    %1113 = vmatprep.subr.mxu0 0.0
    %1114 = vmatpush1.msra.mxu0 0.0
    %1115 = vmatprep.subr.mxu0 0.0
    %1116 = vmatpush1.msra.mxu0 0.0
    %1117 = vmatprep.subr.mxu0 0.0
    %1118 = vmatpush1.msra.mxu0 0.0
    %1119 = vmatprep.subr.mxu0 0.0
    %1120 = vmatpush1.msra.mxu0 0.0
    %1121 = vmatprep.subr.mxu0 0.0
    %1122 = vmatpush1.msra.mxu0 0.0
    %1123 = vmatprep.subr.mxu0 0.0
    %1124 = vmatpush1.msra.mxu0 0.0
    %1125 = vmatprep.subr.mxu0 0.0
    %1126 = vmatpush1.msra.mxu0 0.0
    %1127 = vmatprep.subr.mxu0 0.0
    %1128 = vmatpush1.msra.mxu0 0.0
    %1129 = vmatprep.subr.mxu0 0.0
    %1130 = vmatpush1.msra.mxu0 0.0
    %1131 = vmatprep.subr.mxu0 0.0
    %1132 = vmatpush1.msra.mxu0 0.0
    %1133 = vmatprep.subr.mxu0 0.0
    %1134 = vmatpush1.msra.mxu0 0.0
    %1135 = vmatprep.subr.mxu0 0.0
    %1136 = vmatpush1.msra.mxu0 0.0
    %1137 = vmatprep.subr.mxu0 0.0
    %1138 = vmatpush1.msra.mxu0 0.0
    %1139 = vmatprep.subr.mxu0 0.0
    %1140 = vmatpush1.msra.mxu0 0.0
    %1141 = vmatprep.subr.mxu0 0.0
    %1142 = vmatpush1.msra.mxu0 0.0
    %1143 = vmatprep.subr.mxu0 0.0
    %1144 = vmatpush1.msra.mxu0 0.0
    %1145 = vmatprep.subr.mxu0 0.0
    %1146 = vmatpush1.msra.mxu0 0.0
    %1147 = vmatprep.subr.mxu0 0.0
    %1148 = vmatpush1.msra.mxu0 0.0
    %1149 = vmatprep.subr.mxu0 0.0
    %1150 = vmatpush1.msra.mxu0 0.0
    %1151 = vmatprep.subr.mxu0 0.0
    %1152 = vmatpush1.msra.mxu0 0.0
    %1153 = vmatprep.subr.mxu0 0.0
    %1154 = vmatpush1.msra.mxu0 0.0
    %1155 = vmatprep.subr.mxu0 0.0
    %1156 = vmatpush1.msra.mxu0 0.0
    %1157 = vmatprep.subr.mxu0 0.0
    %1158 = vmatpush1.msra.mxu0 0.0
    %1159 = vmatprep.subr.mxu0 0.0
    %1160 = vmatpush1.msra.mxu0 0.0
    %1161 = vmatprep.subr.mxu0 0.0
    %1162 = vmatpush1.msra.mxu0 0.0
    %1163 = vmatprep.subr.mxu0 0.0
    %1164 = vmatpush1.msra.mxu0 0.0
    %1165 = vmatprep.subr.mxu0 0.0
    %1166 = vmatpush1.msra.mxu0 0.0
    %1167 = vmatprep.subr.mxu0 0.0
    %1168 = vmatpush1.msra.mxu0 0.0
    %1169 = vmatprep.subr.mxu0 0.0
    %1170 = vmatpush1.msra.mxu0 0.0
    %1171 = vmatprep.subr.mxu0 0.0
    %1172 = vmatpush1.msra.mxu0 0.0
    %1173 = vmatprep.mubr.f32.mxu0 0.0
    %1174 = vmatmul.mubr.f32.gmra.mrb[0].mxu0 %v1098
    %v1175 = vpop.f32.mrb[0].mxu0
    %v1176 = vadd.f32 0.0, %v1175
    %v1177 = vpop.f32.mrb[0].mxu0
    %1178 = vmatprep.mubr.f32.mxu0 0.0
    %1179 = vmatmul.mubr.f32.gmra.mrb[0].mxu0 %v1101
    %v1180 = vpop.f32.mrb[0].mxu0
    %v1181 = vadd.f32 0.0, %v1180
    %v1182 = vpop.f32.mrb[0].mxu0
    %1183 = vmatprep.mubr.f32.mxu0 0.0
    %1184 = vmatmul.mubr.f32.gmra.mrb[0].mxu0 %v1104
    %v1185 = vpop.f32.mrb[0].mxu0
    %v1186 = vadd.f32 0.0, %v1185
    %v1187 = vpop.f32.mrb[0].mxu0
    %1188 = vmatprep.mubr.f32.mxu0 0.0
    %1189 = vmatmul.mubr.f32.gmra.mrb[0].mxu0 %v1107
    %v1190 = vpop.f32.mrb[0].mxu0
    %v1191 = vadd.f32 0.0, %v1190
    %v1192 = vpop.f32.mrb[0].mxu0
    %1193 = vdwg.mxu0
    %v1194 = vrcp.pop %v1081
    %v1195 = vrcp.pop %v1084
    %v1196 = vrcp.pop %v1087
    %v1197 = vrcp.pop %v1090
    %v1198 = vmul.f32 %v1176, %v1194
    %v1199 = vmul.f32 %v1181, %v1195
    %v1200 = vmul.f32 %v1186, %v1196
    %v1201 = vmul.f32 %v1191, %v1197
    %1202 = vrot.lane.b32.xlu0 %v236, 104
    %v1203 = vpop.permute.xlu0 %1202
    %1204 = vrot.lane.b32.xlu0 %v241, 104
    %v1205 = vpop.permute.xlu0 %1204
    %1206 = vrot.lane.b32.xlu0 %v246, 104
    %v1207 = vpop.permute.xlu0 %1206
    %1208 = vrot.lane.b32.xlu0 %v251, 104
    %v1209 = vpop.permute.xlu0 %1208
    %1210 = vrot.lane.b32.xlu0 %v338, 104
    %v1211 = vpop.permute.xlu0 %1210
    %1212 = vrot.lane.b32.xlu0 %v343, 104
    %v1213 = vpop.permute.xlu0 %1212
    %v1214 = vsel %vm442, %v1203, 0
    %v1216 = vsel %vm442, %v1205, 0
    %v1218 = vsel %vm442, %v1207, 0
    %v1220 = vsel %vm442, %v1209, 0
    %v1222 = vsel %vm442, %v1211, 0
    %v1224 = vsel %vm442, %v1213, 0
    %1226 = vmatprep.subr.mxu0 0.0
    %1227 = vmatpush1.xpose.msra.mxu0 %v1222
    %1228 = vmatprep.subr.mxu0 0.0
    %1229 = vmatpush1.xpose.msra.mxu0 %v1224
    %1230 = vmatprep.subr.mxu0 0.0
    %1231 = vmatpush1.xpose.msra.mxu0 0.0
    %1232 = vmatprep.subr.mxu0 0.0
    %1233 = vmatpush1.xpose.msra.mxu0 0.0
    %1234 = vmatprep.subr.mxu0 0.0
    %1235 = vmatpush1.xpose.msra.mxu0 0.0
    %1236 = vmatprep.subr.mxu0 0.0
    %1237 = vmatpush1.xpose.msra.mxu0 0.0
    %1238 = vmatprep.subr.mxu0 0.0
    %1239 = vmatpush1.xpose.msra.mxu0 0.0
    %1240 = vmatprep.subr.mxu0 0.0
    %1241 = vmatpush1.xpose.msra.mxu0 0.0
    %1242 = vmatprep.subr.mxu0 0.0
    %1243 = vmatpush1.xpose.msra.mxu0 0.0
    %1244 = vmatprep.subr.mxu0 0.0
    %1245 = vmatpush1.xpose.msra.mxu0 0.0
    %1246 = vmatprep.subr.mxu0 0.0
    %1247 = vmatpush1.xpose.msra.mxu0 0.0
    %1248 = vmatprep.subr.mxu0 0.0
    %1249 = vmatpush1.xpose.msra.mxu0 0.0
    %1250 = vmatprep.subr.mxu0 0.0
    %1251 = vmatpush1.xpose.msra.mxu0 0.0
    %1252 = vmatprep.subr.mxu0 0.0
    %1253 = vmatpush1.xpose.msra.mxu0 0.0
    %1254 = vmatprep.subr.mxu0 0.0
    %1255 = vmatpush1.xpose.msra.mxu0 0.0
    %1256 = vmatprep.subr.mxu0 0.0
    %1257 = vmatpush1.xpose.msra.mxu0 0.0
    %1258 = vmatprep.subr.mxu0 0.0
    %1259 = vmatpush1.xpose.msra.mxu0 0.0
    %1260 = vmatprep.subr.mxu0 0.0
    %1261 = vmatpush1.xpose.msra.mxu0 0.0
    %1262 = vmatprep.subr.mxu0 0.0
    %1263 = vmatpush1.xpose.msra.mxu0 0.0
    %1264 = vmatprep.subr.mxu0 0.0
    %1265 = vmatpush1.xpose.msra.mxu0 0.0
    %1266 = vmatprep.subr.mxu0 0.0
    %1267 = vmatpush1.xpose.msra.mxu0 0.0
    %1268 = vmatprep.subr.mxu0 0.0
    %1269 = vmatpush1.xpose.msra.mxu0 0.0
    %1270 = vmatprep.subr.mxu0 0.0
    %1271 = vmatpush1.xpose.msra.mxu0 0.0
    %1272 = vmatprep.subr.mxu0 0.0
    %1273 = vmatpush1.xpose.msra.mxu0 0.0
    %1274 = vmatprep.subr.mxu0 0.0
    %1275 = vmatpush1.xpose.msra.mxu0 0.0
    %1276 = vmatprep.subr.mxu0 0.0
    %1277 = vmatpush1.xpose.msra.mxu0 0.0
    %1278 = vmatprep.subr.mxu0 0.0
    %1279 = vmatpush1.xpose.msra.mxu0 0.0
    %1280 = vmatprep.subr.mxu0 0.0
    %1281 = vmatpush1.xpose.msra.mxu0 0.0
    %1282 = vmatprep.subr.mxu0 0.0
    %1283 = vmatpush1.xpose.msra.mxu0 0.0
    %1284 = vmatprep.subr.mxu0 0.0
    %1285 = vmatpush1.xpose.msra.mxu0 0.0
    %1286 = vmatprep.subr.mxu0 0.0
    %1287 = vmatpush1.xpose.msra.mxu0 0.0
    %1288 = vmatprep.subr.mxu0 0.0
    %1289 = vmatpush1.xpose.msra.mxu0 0.0
    %1290 = vmatprep.mubr.f32.mxu0 0.0
    %1291 = vmatmul.mubr.f32.gmra.mrb[0].mxu0 %v1214
    %v1292 = vpop.f32.mrb[0].mxu0
    %v1293 = vadd.f32 %v438, %v1292
    %v1294 = vpop.f32.mrb[0].mxu0
    %1295 = vmatprep.mubr.f32.mxu0 0.0
    %1296 = vmatmul.mubr.f32.gmra.mrb[0].mxu0 %v1216
    %v1297 = vpop.f32.mrb[0].mxu0
    %v1298 = vadd.f32 %v439, %v1297
    %v1299 = vpop.f32.mrb[0].mxu0
    %1300 = vmatprep.mubr.f32.mxu0 0.0
    %1301 = vmatmul.mubr.f32.gmra.mrb[0].mxu0 %v1218
    %v1302 = vpop.f32.mrb[0].mxu0
    %v1303 = vadd.f32 %v440, %v1302
    %v1304 = vpop.f32.mrb[0].mxu0
    %1305 = vmatprep.mubr.f32.mxu0 0.0
    %1306 = vmatmul.mubr.f32.gmra.mrb[0].mxu0 %v1220
    %v1307 = vpop.f32.mrb[0].mxu0
    %v1308 = vadd.f32 %v441, %v1307
    %v1309 = vpop.f32.mrb[0].mxu0
    %1310 = vdwg.mxu0
    %v1311 = vsel %vm546, %v1293, -inf
    %1312 = vmax.xlane.f32.xlu0 %v1311
    %v1313 = vpop.xlane.xlu0 %1312
    %v1314 = vsel %vm546, %v1298, -inf
    %1315 = vmax.xlane.f32.xlu0 %v1314
    %v1316 = vpop.xlane.xlu0 %1315
    %v1317 = vsel %vm546, %v1303, -inf
    %1318 = vmax.xlane.f32.xlu0 %v1317
    %v1319 = vpop.xlane.xlu0 %1318
    %v1320 = vsel %vm546, %v1308, -inf
    %1321 = vmax.xlane.f32.xlu0 %v1320
    %v1322 = vpop.xlane.xlu0 %1321
    %v1323 = vsub.f32 %v1293, %v1313
    %v1324 = vsub.f32 %v1298, %v1316
    %v1325 = vsub.f32 %v1303, %v1319
    %v1326 = vsub.f32 %v1308, %v1322
    %v1327 = vmul.f32 %v1323, 1.442695
    %v1328 = vpow.pop %v1327
    %v1329 = vmul.f32 %v1324, 1.442695
    %v1330 = vpow.pop %v1329
    %v1331 = vmul.f32 %v1325, 1.442695
    %v1332 = vpow.pop %v1331
    %v1333 = vmul.f32 %v1326, 1.442695
    %v1334 = vpow.pop %v1333
    %v1335 = vsel %vm546, %v1328, 0.0
    %1336 = vadd.xlane.f32.xlu0 %v1335
    %v1337 = vpop.xlane.xlu0 %1336
    %v1338 = vsel %vm546, %v1330, 0.0
    %1339 = vadd.xlane.f32.xlu0 %v1338
    %v1340 = vpop.xlane.xlu0 %1339
    %v1341 = vsel %vm546, %v1332, 0.0
    %1342 = vadd.xlane.f32.xlu0 %v1341
    %v1343 = vpop.xlane.xlu0 %1342
    %v1344 = vsel %vm546, %v1334, 0.0
    %1345 = vadd.xlane.f32.xlu0 %v1344
    %v1346 = vpop.xlane.xlu0 %1345
    %1347 = vrot.lane.b32.xlu0 %v430, 104
    %v1348 = vpop.permute.xlu0 %1347
    %1349 = vrot.lane.b32.xlu0 %v435, 104
    %v1350 = vpop.permute.xlu0 %1349
    %v1354 = vsel %vm546, %v1328, 0
    %v1357 = vsel %vm546, %v1330, 0
    %v1360 = vsel %vm546, %v1332, 0
    %v1363 = vsel %vm546, %v1334, 0
    %1365 = vmatprep.subr.mxu0 0.0
    %1366 = vmatpush1.msra.mxu0 %v1348
    %1367 = vmatprep.subr.mxu0 0.0
    %1368 = vmatpush1.msra.mxu0 %v1350
    %1369 = vmatprep.subr.mxu0 0.0
    %1370 = vmatpush1.msra.mxu0 0.0
    %1371 = vmatprep.subr.mxu0 0.0
    %1372 = vmatpush1.msra.mxu0 0.0
    %1373 = vmatprep.subr.mxu0 0.0
    %1374 = vmatpush1.msra.mxu0 0.0
    %1375 = vmatprep.subr.mxu0 0.0
    %1376 = vmatpush1.msra.mxu0 0.0
    %1377 = vmatprep.subr.mxu0 0.0
    %1378 = vmatpush1.msra.mxu0 0.0
    %1379 = vmatprep.subr.mxu0 0.0
    %1380 = vmatpush1.msra.mxu0 0.0
    %1381 = vmatprep.subr.mxu0 0.0
    %1382 = vmatpush1.msra.mxu0 0.0
    %1383 = vmatprep.subr.mxu0 0.0
    %1384 = vmatpush1.msra.mxu0 0.0
    %1385 = vmatprep.subr.mxu0 0.0
    %1386 = vmatpush1.msra.mxu0 0.0
    %1387 = vmatprep.subr.mxu0 0.0
    %1388 = vmatpush1.msra.mxu0 0.0
    %1389 = vmatprep.subr.mxu0 0.0
    %1390 = vmatpush1.msra.mxu0 0.0
    %1391 = vmatprep.subr.mxu0 0.0
    %1392 = vmatpush1.msra.mxu0 0.0
    %1393 = vmatprep.subr.mxu0 0.0
    %1394 = vmatpush1.msra.mxu0 0.0
    %1395 = vmatprep.subr.mxu0 0.0
    %1396 = vmatpush1.msra.mxu0 0.0
    %1397 = vmatprep.subr.mxu0 0.0
    %1398 = vmatpush1.msra.mxu0 0.0
    %1399 = vmatprep.subr.mxu0 0.0
    %1400 = vmatpush1.msra.mxu0 0.0
    %1401 = vmatprep.subr.mxu0 0.0
    %1402 = vmatpush1.msra.mxu0 0.0
    %1403 = vmatprep.subr.mxu0 0.0
    %1404 = vmatpush1.msra.mxu0 0.0
    %1405 = vmatprep.subr.mxu0 0.0
    %1406 = vmatpush1.msra.mxu0 0.0
    %1407 = vmatprep.subr.mxu0 0.0
    %1408 = vmatpush1.msra.mxu0 0.0
    %1409 = vmatprep.subr.mxu0 0.0
    %1410 = vmatpush1.msra.mxu0 0.0
    %1411 = vmatprep.subr.mxu0 0.0
    %1412 = vmatpush1.msra.mxu0 0.0
    %1413 = vmatprep.subr.mxu0 0.0
    %1414 = vmatpush1.msra.mxu0 0.0
    %1415 = vmatprep.subr.mxu0 0.0
    %1416 = vmatpush1.msra.mxu0 0.0
    %1417 = vmatprep.subr.mxu0 0.0
    %1418 = vmatpush1.msra.mxu0 0.0
    %1419 = vmatprep.subr.mxu0 0.0
    %1420 = vmatpush1.msra.mxu0 0.0
    %1421 = vmatprep.subr.mxu0 0.0
    %1422 = vmatpush1.msra.mxu0 0.0
    %1423 = vmatprep.subr.mxu0 0.0
    %1424 = vmatpush1.msra.mxu0 0.0
    %1425 = vmatprep.subr.mxu0 0.0
    %1426 = vmatpush1.msra.mxu0 0.0
    %1427 = vmatprep.subr.mxu0 0.0
    %1428 = vmatpush1.msra.mxu0 0.0
    %1429 = vmatprep.mubr.f32.mxu0 0.0
    %1430 = vmatmul.mubr.f32.gmra.mrb[0].mxu0 %v1354
    %v1431 = vpop.f32.mrb[0].mxu0
    %v1432 = vadd.f32 0.0, %v1431
    %v1433 = vpop.f32.mrb[0].mxu0
    %1434 = vmatprep.mubr.f32.mxu0 0.0
    %1435 = vmatmul.mubr.f32.gmra.mrb[0].mxu0 %v1357
    %v1436 = vpop.f32.mrb[0].mxu0
    %v1437 = vadd.f32 0.0, %v1436
    %v1438 = vpop.f32.mrb[0].mxu0
    %1439 = vmatprep.mubr.f32.mxu0 0.0
    %1440 = vmatmul.mubr.f32.gmra.mrb[0].mxu0 %v1360
    %v1441 = vpop.f32.mrb[0].mxu0
    %v1442 = vadd.f32 0.0, %v1441
    %v1443 = vpop.f32.mrb[0].mxu0
    %1444 = vmatprep.mubr.f32.mxu0 0.0
    %1445 = vmatmul.mubr.f32.gmra.mrb[0].mxu0 %v1363
    %v1446 = vpop.f32.mrb[0].mxu0
    %v1447 = vadd.f32 0.0, %v1446
    %v1448 = vpop.f32.mrb[0].mxu0
    %1449 = vdwg.mxu0
    %v1450 = vrcp.pop %v1337
    %v1451 = vrcp.pop %v1340
    %v1452 = vrcp.pop %v1343
    %v1453 = vrcp.pop %v1346
    %v1454 = vmul.f32 %v1432, %v1450
    %v1455 = vmul.f32 %v1437, %v1451
    %v1456 = vmul.f32 %v1442, %v1452
    %v1457 = vmul.f32 %v1447, %v1453
    %1462 = vrot.lane.b32.xlu0 %v942, 8
    %v1463 = vpop.permute.xlu0 %1462
    %1464 = vrot.lane.b32.xlu0 %v943, 8
    %v1465 = vpop.permute.xlu0 %1464
    %1466 = vrot.lane.b32.xlu0 %v944, 8
    %v1467 = vpop.permute.xlu0 %1466
    %1468 = vrot.lane.b32.xlu0 %v945, 8
    %v1469 = vpop.permute.xlu0 %1468
    %1478 = vrot.lane.b32.xlu0 %v1198, 16
    %v1479 = vpop.permute.xlu0 %1478
    %1480 = vrot.lane.b32.xlu0 %v1199, 16
    %v1481 = vpop.permute.xlu0 %1480
    %1482 = vrot.lane.b32.xlu0 %v1200, 16
    %v1483 = vpop.permute.xlu0 %1482
    %1484 = vrot.lane.b32.xlu0 %v1201, 16
    %v1485 = vpop.permute.xlu0 %1484
    %1494 = vrot.lane.b32.xlu0 %v1454, 24
    %v1495 = vpop.permute.xlu0 %1494
    %1496 = vrot.lane.b32.xlu0 %v1455, 24
    %v1497 = vpop.permute.xlu0 %1496
    %1498 = vrot.lane.b32.xlu0 %v1456, 24
    %v1499 = vpop.permute.xlu0 %1498
    %1500 = vrot.lane.b32.xlu0 %v1457, 24
    %v1501 = vpop.permute.xlu0 %1500
    %v1506 = vsel %vm442, %v684, %v1463
    %v1507 = vsel %vm442, %v685, %v1465
    %v1508 = vsel %vm442, %v686, %v1467
    %v1509 = vsel %vm442, %v687, %v1469
    %v1510 = vsel %vm546, %v1506, %v1479
    %v1511 = vsel %vm546, %v1507, %v1481
    %v1512 = vsel %vm546, %v1508, %v1483
    %v1513 = vsel %vm546, %v1509, %v1485
    %vm1514 = vcmask 195584
    %v1515 = vsel %vm1514, %v1510, %v1495
    %v1516 = vsel %vm1514, %v1511, %v1497
    %v1517 = vsel %vm1514, %v1512, %v1499
    %v1518 = vsel %vm1514, %v1513, %v1501
    %v1519 = vld [vmem:[#allocation11] sm:$0xff]
    %v1520 = vld [vmem:[#allocation11 + $0x8] sm:$0xff]
    %v1521 = vld [vmem:[#allocation11 + $0x10] sm:$0xff]
    %v1522 = vld [vmem:[#allocation11 + $0x18] sm:$0xff]
    %v1523 = vld [vmem:[%s12] sm:$0x1]
    %v1525 = vlaneseq
    %v1526 = vshrl.u32 %v1525, 7
    %v1527 = vsub.s32 0, %v1526
    %v1528 = vrot.slane %v1523, %v1527
    %v1531 = vsel %vm156, %v1515, 0
    %v1534 = vsel %vm156, %v1516, 0
    %v1537 = vsel %vm156, %v1517, 0
    %v1540 = vsel %vm156, %v1518, 0
    %1542 = vmatprep.subr.mxu0 0.0
    %1543 = vmatpush1.msra.mxu0 %v1519
    %1544 = vmatprep.subr.mxu0 0.0
    %1545 = vmatpush1.msra.mxu0 %v1520
    %1546 = vmatprep.subr.mxu0 0.0
    %1547 = vmatpush1.msra.mxu0 %v1521
    %1548 = vmatprep.subr.mxu0 0.0
    %1549 = vmatpush1.msra.mxu0 %v1522
    %1550 = vmatprep.subr.mxu0 0.0
    %1551 = vmatpush1.msra.mxu0 0.0
    %1552 = vmatprep.subr.mxu0 0.0
    %1553 = vmatpush1.msra.mxu0 0.0
    %1554 = vmatprep.subr.mxu0 0.0
    %1555 = vmatpush1.msra.mxu0 0.0
    %1556 = vmatprep.subr.mxu0 0.0
    %1557 = vmatpush1.msra.mxu0 0.0
    %1558 = vmatprep.subr.mxu0 0.0
    %1559 = vmatpush1.msra.mxu0 0.0
    %1560 = vmatprep.subr.mxu0 0.0
    %1561 = vmatpush1.msra.mxu0 0.0
    %1562 = vmatprep.subr.mxu0 0.0
    %1563 = vmatpush1.msra.mxu0 0.0
    %1564 = vmatprep.subr.mxu0 0.0
    %1565 = vmatpush1.msra.mxu0 0.0
    %1566 = vmatprep.subr.mxu0 0.0
    %1567 = vmatpush1.msra.mxu0 0.0
    %1568 = vmatprep.subr.mxu0 0.0
    %1569 = vmatpush1.msra.mxu0 0.0
    %1570 = vmatprep.subr.mxu0 0.0
    %1571 = vmatpush1.msra.mxu0 0.0
    %1572 = vmatprep.subr.mxu0 0.0
    %1573 = vmatpush1.msra.mxu0 0.0
    %1574 = vmatprep.subr.mxu0 0.0
    %1575 = vmatpush1.msra.mxu0 0.0
    %1576 = vmatprep.subr.mxu0 0.0
    %1577 = vmatpush1.msra.mxu0 0.0
    %1578 = vmatprep.subr.mxu0 0.0
    %1579 = vmatpush1.msra.mxu0 0.0
    %1580 = vmatprep.subr.mxu0 0.0
    %1581 = vmatpush1.msra.mxu0 0.0
    %1582 = vmatprep.subr.mxu0 0.0
    %1583 = vmatpush1.msra.mxu0 0.0
    %1584 = vmatprep.subr.mxu0 0.0
    %1585 = vmatpush1.msra.mxu0 0.0
    %1586 = vmatprep.subr.mxu0 0.0
    %1587 = vmatpush1.msra.mxu0 0.0
    %1588 = vmatprep.subr.mxu0 0.0
    %1589 = vmatpush1.msra.mxu0 0.0
    %1590 = vmatprep.subr.mxu0 0.0
    %1591 = vmatpush1.msra.mxu0 0.0
    %1592 = vmatprep.subr.mxu0 0.0
    %1593 = vmatpush1.msra.mxu0 0.0
    %1594 = vmatprep.subr.mxu0 0.0
    %1595 = vmatpush1.msra.mxu0 0.0
    %1596 = vmatprep.subr.mxu0 0.0
    %1597 = vmatpush1.msra.mxu0 0.0
    %1598 = vmatprep.subr.mxu0 0.0
    %1599 = vmatpush1.msra.mxu0 0.0
    %1600 = vmatprep.subr.mxu0 0.0
    %1601 = vmatpush1.msra.mxu0 0.0
    %1602 = vmatprep.subr.mxu0 0.0
    %1603 = vmatpush1.msra.mxu0 0.0
    %1604 = vmatprep.subr.mxu0 0.0
    %1605 = vmatpush1.msra.mxu0 0.0
    %1606 = vmatprep.mubr.f32.mxu0 0.0
    %1607 = vmatmul.mubr.f32.gmra.mrb[0].mxu0 %v1531
    %v1608 = vpop.f32.mrb[0].mxu0
    %v1609 = vadd.f32 %v1528, %v1608
    %v1610 = vpop.f32.mrb[0].mxu0
    %1611 = vmatprep.mubr.f32.mxu0 0.0
    %1612 = vmatmul.mubr.f32.gmra.mrb[0].mxu0 %v1534
    %v1613 = vpop.f32.mrb[0].mxu0
    %v1614 = vadd.f32 %v1528, %v1613
    %v1615 = vpop.f32.mrb[0].mxu0
    %1616 = vmatprep.mubr.f32.mxu0 0.0
    %1617 = vmatmul.mubr.f32.gmra.mrb[0].mxu0 %v1537
    %v1618 = vpop.f32.mrb[0].mxu0
    %v1619 = vadd.f32 %v1528, %v1618
    %v1620 = vpop.f32.mrb[0].mxu0
    %1621 = vmatprep.mubr.f32.mxu0 0.0
    %1622 = vmatmul.mubr.f32.gmra.mrb[0].mxu0 %v1540
    %v1623 = vpop.f32.mrb[0].mxu0
    %v1624 = vadd.f32 %v1528, %v1623
    %v1625 = vpop.f32.mrb[0].mxu0
    %1626 = vdwg.mxu0
    %v1627 = vmul.f32 %v127, %v1609
    %v1628 = vmul.f32 %v128, %v1614
    %v1629 = vmul.f32 %v129, %v1619
    %v1630 = vmul.f32 %v130, %v1624
    %1631 = vst.msk [vmem:[#allocation13] sm:$0xff] %vm156, %v1627
    %1632 = vst.msk [vmem:[#allocation13 + $0x8] sm:$0xff] %vm156, %v1628
    %1633 = vst.msk [vmem:[#allocation13 + $0x10] sm:$0xff] %vm156, %v1629
    %1634 = vst.msk [vmem:[#allocation13 + $0x18] sm:$0xff] %vm156, %v1630
    // Predicated region
    $region78: #{tpu_custom_call.1} parent=1 // pred_check
      _
    $region79: #{tpu_custom_call.1} parent=1 // pred_check_branch
      %1636 = sbr.rel (0) target = $region81
    $region80: #{tpu_custom_call.1} parent=1 // pred_region
      %s1638 = ssub.s32 512, 512
      %1639 = vsyncadd [#allocation4], %s1638
      %s1640 = sshll.u32 [#allocation13], 4
      %s1641 = int_to_ptr.vmem [resolvable:$true] %s1640
      %1646 = dma.vmem_to_hbm [thread:$0]  %s1641, 512, %s13, [#allocation4], 128, 128, 8
    $region81: #{tpu_custom_call.1} parent=1 // pred_fallthru
      _
    // Predicated region
    $region82: #{tpu_custom_call.1} parent=1 // pred_check
      _
    $region83: #{tpu_custom_call.1} parent=1 // pred_check_branch
      %1648 = sbr.rel (0) target = $region85
    $region84: #{tpu_custom_call.1} parent=1 // pred_region
      %1649 = dma.done [#allocation4], 512
    $region85: #{tpu_custom_call.1} parent=1 // pred_fallthru
      _
    %1650 = vsyncpa [#allocation3], 1
    %1651 = vsyncpa [#allocation6], 1
    %1652 = vsyncpa [#allocation9], 1
    %1653 = vsyncpa [#allocation12], 1
    %1654 = vsyncpa [#allocation4], 1

</llo_original>
